<compile_context>
chip_gen: v5e
topology: v5e:2x2
jax: 0.10.0
libtpu: 0.0.40
codegen_flags: <defaults>
</compile_context>

<pallas_src>
import functools

import jax
import jax.numpy as jnp
from jax.experimental import pallas as pl
from jax.experimental.pallas import tpu as pltpu

LN_EPS = 1e-5  # PyTorch nn.LayerNorm default


# ---------------------------------------------------------------------------
# Fused kernel: fc1 -> [fc2]*layer_N -> fc_out, all in VMEM.
# ---------------------------------------------------------------------------
def _mlp_fused_kernel(x_ref, w1_ref, b1_ref, g1_ref, be1_ref,
                      w2_ref, b2_ref, g2_ref, be2_ref,
                      wo_ref, bo_ref, o_ref, *, hidden_true, layer_n):
    inv_h = 1.0 / float(hidden_true)

    def relu_ln(y, gamma, beta):
        # y: [bt, hp] f32 pre-activation; padded lanes are exactly 0 because
        # weights / bias are zero-padded, so sums over hp == sums over true H.
        y = jnp.maximum(y, 0.0)
        mean = jnp.sum(y, axis=-1, keepdims=True) * inv_h
        ex2 = jnp.sum(y * y, axis=-1, keepdims=True) * inv_h
        var = jnp.maximum(ex2 - mean * mean, 0.0)
        yn = (y - mean) * jax.lax.rsqrt(var + LN_EPS)
        # gamma/beta padded lanes are 0 -> padded lanes of the result stay 0.
        return yn * gamma + beta

    # ---- fc1: Linear (bf16 operands, f32 acc) -> ReLU -> LayerNorm ----
    y = jnp.dot(x_ref[...], w1_ref[...], preferred_element_type=jnp.float32)
    h = relu_ln(y + b1_ref[...], g1_ref[...], be1_ref[...])

    # ---- fc2 x layer_N (stacked weights stay VMEM-resident) ----
    def body(i, h):
        y = jnp.dot(h.astype(w2_ref.dtype), w2_ref[i],
                    preferred_element_type=jnp.float32)
        return relu_ln(y + b2_ref[i], g2_ref[i], be2_ref[i])

    if layer_n > 0:
        h = jax.lax.fori_loop(0, layer_n, body, h, unroll=(layer_n <= 4))

    # ---- fc_out: plain Linear ----
    out = jnp.dot(h.astype(wo_ref.dtype), wo_ref[...],
                  preferred_element_type=jnp.float32)
    o_ref[...] = (out + bo_ref[...]).astype(o_ref.dtype)


# ---------------------------------------------------------------------------
# Helpers
# ---------------------------------------------------------------------------
def _round_up(n, m):
    return ((n + m - 1) // m) * m


def _pad_to(a, shape):
    pads = [(0, t - s) for s, t in zip(a.shape, shape)]
    return jnp.pad(a, pads)


def _const_spec(shape, single_buffer):
    """BlockSpec for a weight array loaded once and reused for every batch tile."""
    idx = lambda i: (0,) * len(shape)
    if single_buffer and hasattr(pl, "Buffered"):
        try:
            return pl.BlockSpec(shape, idx, pipeline_mode=pl.Buffered(1))
        except TypeError:   # pipeline_mode kwarg not available on this version
            pass
    return pl.BlockSpec(shape, idx)


# ---------------------------------------------------------------------------
# One-time parameter preparation: pad to lane-dense 128 shapes, stack fc2,
# cast matmul weights to bf16.  Done OUTSIDE the per-call forward.
# ---------------------------------------------------------------------------
def prepare_params(params, compute_dtype=jnp.bfloat16):
    in_dim, H = params["fc1"]["w"].shape
    out_dim = params["fc_out"]["w"].shape[1]
    L = len(params["fc2"])

    kp = _round_up(in_dim, 128)
    hp = _round_up(H, 128)
    op = _round_up(out_dim, 128)

    w1 = _pad_to(params["fc1"]["w"], (kp, hp)).astype(compute_dtype)
    b1 = _pad_to(params["fc1"]["b"], (1, hp)).astype(jnp.float32)
    g1 = _pad_to(params["fc1"]["gamma"], (1, hp)).astype(jnp.float32)
    be1 = _pad_to(params["fc1"]["beta"], (1, hp)).astype(jnp.float32)

    if L > 0:
        w2 = jnp.stack([_pad_to(p["w"], (hp, hp))
                        for p in params["fc2"]]).astype(compute_dtype)
        b2 = jnp.stack([_pad_to(p["b"], (1, hp))
                        for p in params["fc2"]]).astype(jnp.float32)
        g2 = jnp.stack([_pad_to(p["gamma"], (1, hp))
                        for p in params["fc2"]]).astype(jnp.float32)
        be2 = jnp.stack([_pad_to(p["beta"], (1, hp))
                         for p in params["fc2"]]).astype(jnp.float32)
    else:  # keep shapes valid when there are no hidden blocks
        w2 = jnp.zeros((1, hp, hp), compute_dtype)
        b2 = jnp.zeros((1, 1, hp), jnp.float32)
        g2 = jnp.zeros((1, 1, hp), jnp.float32)
        be2 = jnp.zeros((1, 1, hp), jnp.float32)

    wo = _pad_to(params["fc_out"]["w"], (hp, op)).astype(compute_dtype)
    bo = _pad_to(params["fc_out"]["b"], (1, op)).astype(jnp.float32)

    arrays = dict(w1=w1, b1=b1, g1=g1, be1=be1,
                  w2=w2, b2=b2, g2=g2, be2=be2, wo=wo, bo=bo)
    meta = dict(input_dim=in_dim, hidden=H, output_dim=out_dim, layer_N=L)
    return arrays, meta


# ---------------------------------------------------------------------------
# Forward: single fused pallas_call over a batch-tiled grid.
# ---------------------------------------------------------------------------
@functools.partial(jax.jit, static_argnames=("hidden_true", "layer_n",
                                             "out_dim_true", "single_buffer"))
def _mlp_forward_impl(arrays, x, *, hidden_true, layer_n, out_dim_true,
                      single_buffer=True):
    B = x.shape[0]
    w1, w2, wo = arrays["w1"], arrays["w2"], arrays["wo"]
    kp, hp = w1.shape
    op = wo.shape[1]
    L = layer_n

    # Batch tiling: full-batch tile up to 512 rows; above that, 512-row tiles
    # (multiple of 256 for the MXU; >=2 tiles lets v7x shard across its 2 TCs).
    bp8 = _round_up(B, 8)
    if bp8 <= 512:
        bt = bp8
        bp = bp8
    else:
        bt = 512
        bp = _round_up(bp8, bt)
    nb = bp // bt

    xp = _pad_to(x, (bp, kp)).astype(w1.dtype)   # lane-dense, bf16 input tile

    # --- explicit VMEM budget (weights single-buffered, activations 2x) ---
    wbytes = (w1.size * w1.dtype.itemsize + w2.size * w2.dtype.itemsize +
              wo.size * wo.dtype.itemsize)
    vbytes = sum(arrays[k].size * arrays[k].dtype.itemsize
                 for k in ("b1", "g1", "be1", "b2", "g2", "be2", "bo"))
    wbufs = 1 if single_buffer else 2
    act_bytes = 2 * (bt * kp * xp.dtype.itemsize + bt * op * 4) + 6 * bt * hp * 4
    vmem_limit = int(min(96 * 2 ** 20,
                         max(32 * 2 ** 20,
                             int(1.5 * (wbufs * wbytes + 2 * vbytes + act_bytes)))))

    flops = 2 * bp * (kp * hp + L * hp * hp + hp * op)
    bytes_accessed = (xp.size * xp.dtype.itemsize + wbytes + vbytes + bp * op * 4)
    cost = pl.CostEstimate(flops=int(flops),
                           transcendentals=int(bp * (L + 1)),
                           bytes_accessed=int(bytes_accessed))

    kernel = functools.partial(_mlp_fused_kernel,
                               hidden_true=hidden_true, layer_n=L)
    cs = lambda a: _const_spec(a.shape, single_buffer)

    out = pl.pallas_call(
        kernel,
        out_shape=jax.ShapeDtypeStruct((bp, op), jnp.float32),
        grid=(nb,),
        in_specs=[
            pl.BlockSpec((bt, kp), lambda i: (i, 0)),            # x: batch-tiled
            cs(arrays["w1"]), cs(arrays["b1"]),                   # fc1 params
            cs(arrays["g1"]), cs(arrays["be1"]),
            cs(arrays["w2"]), cs(arrays["b2"]),                   # stacked fc2
            cs(arrays["g2"]), cs(arrays["be2"]),
            cs(arrays["wo"]), cs(arrays["bo"]),                   # fc_out
        ],
        out_specs=pl.BlockSpec((bt, op), lambda i: (i, 0)),
        compiler_params=pltpu.CompilerParams(
            dimension_semantics=("parallel",),
            vmem_limit_bytes=vmem_limit),
        cost_estimate=cost,
    )(xp, arrays["w1"], arrays["b1"], arrays["g1"], arrays["be1"],
      arrays["w2"], arrays["b2"], arrays["g2"], arrays["be2"],
      arrays["wo"], arrays["bo"])

    return out[:B, :out_dim_true]


def mlp_layer_forward(prepared, x, single_buffer=True):
    arrays, meta = prepared
    return _mlp_forward_impl(arrays, x,
                             hidden_true=meta["hidden"],
                             layer_n=meta["layer_N"],
                             out_dim_true=meta["output_dim"],
                             single_buffer=single_buffer)


# ---------------------------------------------------------------------------
# Parameter initialization (mirrors the module: orthogonal * gain('relu'),
# zero bias, LayerNorm gamma=1 / beta=0).  Weights stored [in, out] so the
# kernel computes x @ W + b (== PyTorch x @ W.T with W [out, in]).
# ---------------------------------------------------------------------------
def init_params(key, input_dim, hidden_size, layer_N, output_dim):
    gain = jnp.sqrt(2.0)  # relu gain
    orth = jax.nn.initializers.orthogonal()

    def make_layer(k, d_in, d_out):
        w = (orth(k, (d_in, d_out), jnp.float32) * gain).astype(jnp.float32)
        return dict(w=w,
                    b=jnp.zeros((1, d_out), jnp.float32),
                    gamma=jnp.ones((1, d_out), jnp.float32),
                    beta=jnp.zeros((1, d_out), jnp.float32))

    keys = jax.random.split(key, layer_N + 2)
    return {
        "fc1": make_layer(keys[0], input_dim, hidden_size),
        "fc2": [make_layer(keys[1 + i], hidden_size, hidden_size)
                for i in range(layer_N)],
        "fc_out": {
            "w": (orth(keys[-1], (hidden_size, output_dim), jnp.float32)
                  * gain).astype(jnp.float32),
            "b": jnp.zeros((1, output_dim), jnp.float32),
        },
    }


# ---------------------------------------------------------------------------
# Pure-JAX (f32) reference for a correctness check.
# ---------------------------------------------------------------------------
def mlp_layer_ref(params, x):
    def block(p, x):
        y = jnp.maximum(x @ p["w"] + p["b"], 0.0)
        mean = jnp.mean(y, axis=-1, keepdims=True)
        var = jnp.mean((y - mean) ** 2, axis=-1, keepdims=True)
        y = (y - mean) / jnp.sqrt(var + LN_EPS)
        return y * p["gamma"] + p["beta"]

    x = block(params["fc1"], x)
    for p in params["fc2"]:
        x = block(p, x)
    return x @ params["fc_out"]["w"] + params["fc_out"]["b"]


if __name__ == "__main__":
    # Small shapes consistent with the module (flat feature vectors in/out).
    batch = 8
    input_dim = 24
    hidden_size = 32
    layer_N = 2
    output_dim = 16

    key = jax.random.PRNGKey(0)
    pkey, xkey = jax.random.split(key)
    params = init_params(pkey, input_dim, hidden_size, layer_N, output_dim)
    x = jax.random.normal(xkey, (batch, input_dim), jnp.float32)

    prepared = prepare_params(params)   # one-time pad/stack/bf16 cast

    try:
        out = jax.block_until_ready(mlp_layer_forward(prepared, x))
    except Exception:
        # Fallback if single-buffered constant specs are unsupported on this
        # jax/libtpu version: rebuild with default double-buffered weights.
        out = jax.block_until_ready(
            mlp_layer_forward(prepared, x, single_buffer=False))

    ref = mlp_layer_ref(params, x)
    assert out.shape == (batch, output_dim), out.shape
    # bf16 MXU operands (f32 accumulation) -> compare against the exact f32
    # reference with a bf16-level tolerance.
    assert jnp.allclose(out, ref, atol=5e-2, rtol=5e-2), "mismatch vs JAX reference"

    print("KERNEL_OK")
</pallas_src>

<mosaic_0001>
module attributes {stable_mosaic.version = 11 : i64} {
  func.func @_mlp_fused_kernel(%arg0: i32, %arg1: memref<8x128xbf16, #tpu.memory_space<vmem>>, %arg2: memref<128x128xbf16, #tpu.memory_space<vmem>>, %arg3: memref<1x128xf32, #tpu.memory_space<vmem>>, %arg4: memref<1x128xf32, #tpu.memory_space<vmem>>, %arg5: memref<1x128xf32, #tpu.memory_space<vmem>>, %arg6: memref<2x128x128xbf16, #tpu.memory_space<vmem>>, %arg7: memref<2x1x128xf32, #tpu.memory_space<vmem>>, %arg8: memref<2x1x128xf32, #tpu.memory_space<vmem>>, %arg9: memref<2x1x128xf32, #tpu.memory_space<vmem>>, %arg10: memref<128x128xbf16, #tpu.memory_space<vmem>>, %arg11: memref<1x128xf32, #tpu.memory_space<vmem>>, %arg12: memref<8x128xf32, #tpu.memory_space<vmem>>) attributes {dimension_semantics = [#tpu.dimension_semantics<parallel>], iteration_bounds = array<i64: 1>, scalar_prefetch = 0 : i64, scratch_operands = 0 : i64, tpu.core_type = #tpu.core_type<tc>, window_params = [{transform_indices = @transform_0, window_bounds = array<i64: 8, 128>}, {pipeline_mode = #tpu.pipeline_mode<synchronous>, transform_indices = @transform_1, window_bounds = array<i64: 128, 128>}, {pipeline_mode = #tpu.pipeline_mode<synchronous>, transform_indices = @transform_2, window_bounds = array<i64: 1, 128>}, {pipeline_mode = #tpu.pipeline_mode<synchronous>, transform_indices = @transform_3, window_bounds = array<i64: 1, 128>}, {pipeline_mode = #tpu.pipeline_mode<synchronous>, transform_indices = @transform_4, window_bounds = array<i64: 1, 128>}, {pipeline_mode = #tpu.pipeline_mode<synchronous>, transform_indices = @transform_5, window_bounds = array<i64: 2, 128, 128>}, {pipeline_mode = #tpu.pipeline_mode<synchronous>, transform_indices = @transform_6, window_bounds = array<i64: 2, 1, 128>}, {pipeline_mode = #tpu.pipeline_mode<synchronous>, transform_indices = @transform_7, window_bounds = array<i64: 2, 1, 128>}, {pipeline_mode = #tpu.pipeline_mode<synchronous>, transform_indices = @transform_8, window_bounds = array<i64: 2, 1, 128>}, {pipeline_mode = #tpu.pipeline_mode<synchronous>, transform_indices = @transform_9, window_bounds = array<i64: 128, 128>}, {pipeline_mode = #tpu.pipeline_mode<synchronous>, transform_indices = @transform_10, window_bounds = array<i64: 1, 128>}, {transform_indices = @transform_11, window_bounds = array<i64: 8, 128>}]} {
    %c0 = arith.constant 0 : index
    %c0_0 = arith.constant 0 : index
    %0 = vector.load %arg1[%c0, %c0_0] : memref<8x128xbf16, #tpu.memory_space<vmem>>, vector<8x128xbf16>
    %c0_1 = arith.constant 0 : index
    %c0_2 = arith.constant 0 : index
    %1 = vector.load %arg2[%c0_1, %c0_2] : memref<128x128xbf16, #tpu.memory_space<vmem>>, vector<128x128xbf16>
    %cst = arith.constant dense<0.000000e+00> : vector<8x128xf32>
    %2 = tpu.matmul %0, %1, %cst {dimension_numbers = #tpu.dot_dimension_numbers<[1], [0], [0], [1], [0, 0, 1, 1], [], []>} : vector<8x128xbf16>, vector<128x128xbf16>, vector<8x128xf32> -> vector<8x128xf32>
    %c0_3 = arith.constant 0 : index
    %c0_4 = arith.constant 0 : index
    %3 = vector.load %arg3[%c0_3, %c0_4] : memref<1x128xf32, #tpu.memory_space<vmem>>, vector<1x128xf32>
    %4 = vector.broadcast %3 : vector<1x128xf32> to vector<8x128xf32>
    %5 = arith.addf %2, %4 : vector<8x128xf32>
    %c0_5 = arith.constant 0 : index
    %c0_6 = arith.constant 0 : index
    %6 = vector.load %arg4[%c0_5, %c0_6] : memref<1x128xf32, #tpu.memory_space<vmem>>, vector<1x128xf32>
    %c0_7 = arith.constant 0 : index
    %c0_8 = arith.constant 0 : index
    %7 = vector.load %arg5[%c0_7, %c0_8] : memref<1x128xf32, #tpu.memory_space<vmem>>, vector<1x128xf32>
    %cst_9 = arith.constant 0.000000e+00 : f32
    %8 = vector.broadcast %cst_9 : f32 to vector<8x128xf32>
    %9 = arith.maximumf %5, %8 : vector<8x128xf32>
    %cst_10 = arith.constant dense<0.000000e+00> : vector<8xf32>
    %10 = vector.multi_reduction <add>, %9, %cst_10 [1] : vector<8x128xf32> to vector<8xf32>
    %11 = vector.shape_cast %10 : vector<8xf32> to vector<8x1xf32>
    %cst_11 = arith.constant 3.125000e-02 : f32
    %12 = vector.broadcast %cst_11 : f32 to vector<8x1xf32>
    %13 = arith.mulf %11, %12 : vector<8x1xf32>
    %14 = arith.mulf %9, %9 : vector<8x128xf32>
    %cst_12 = arith.constant dense<0.000000e+00> : vector<8xf32>
    %15 = vector.multi_reduction <add>, %14, %cst_12 [1] : vector<8x128xf32> to vector<8xf32>
    %16 = vector.shape_cast %15 : vector<8xf32> to vector<8x1xf32>
    %cst_13 = arith.constant 3.125000e-02 : f32
    %17 = vector.broadcast %cst_13 : f32 to vector<8x1xf32>
    %18 = arith.mulf %16, %17 : vector<8x1xf32>
    %19 = arith.mulf %13, %13 : vector<8x1xf32>
    %20 = arith.subf %18, %19 : vector<8x1xf32>
    %cst_14 = arith.constant 0.000000e+00 : f32
    %21 = vector.broadcast %cst_14 : f32 to vector<8x1xf32>
    %22 = arith.maximumf %20, %21 : vector<8x1xf32>
    %23 = vector.broadcast %13 : vector<8x1xf32> to vector<8x128xf32>
    %24 = arith.subf %9, %23 : vector<8x128xf32>
    %cst_15 = arith.constant 9.99999974E-6 : f32
    %25 = vector.broadcast %cst_15 : f32 to vector<8x1xf32>
    %26 = arith.addf %22, %25 : vector<8x1xf32>
    %27 = math.rsqrt %26 : vector<8x1xf32>
    %28 = vector.broadcast %27 : vector<8x1xf32> to vector<8x128xf32>
    %29 = arith.mulf %24, %28 : vector<8x128xf32>
    %30 = vector.broadcast %6 : vector<1x128xf32> to vector<8x128xf32>
    %31 = arith.mulf %29, %30 : vector<8x128xf32>
    %32 = vector.broadcast %7 : vector<1x128xf32> to vector<8x128xf32>
    %33 = arith.addf %31, %32 : vector<8x128xf32>
    %c0_i32 = arith.constant 0 : i32
    %34 = arith.truncf %33 : vector<8x128xf32> to vector<8x128xbf16>
    %35 = arith.index_cast %c0_i32 : i32 to index
    %c0_16 = arith.constant 0 : index
    %c0_17 = arith.constant 0 : index
    %36 = vector.load %arg6[%35, %c0_16, %c0_17] : memref<2x128x128xbf16, #tpu.memory_space<vmem>>, vector<1x128x128xbf16>
    %37 = vector.shape_cast %36 : vector<1x128x128xbf16> to vector<128x128xbf16>
    %cst_18 = arith.constant dense<0.000000e+00> : vector<8x128xf32>
    %38 = tpu.matmul %34, %37, %cst_18 {dimension_numbers = #tpu.dot_dimension_numbers<[1], [0], [0], [1], [0, 0, 1, 1], [], []>} : vector<8x128xbf16>, vector<128x128xbf16>, vector<8x128xf32> -> vector<8x128xf32>
    %39 = arith.index_cast %c0_i32 : i32 to index
    %c0_19 = arith.constant 0 : index
    %c0_20 = arith.constant 0 : index
    %40 = vector.load %arg7[%39, %c0_19, %c0_20] : memref<2x1x128xf32, #tpu.memory_space<vmem>>, vector<1x1x128xf32>
    %41 = vector.shape_cast %40 : vector<1x1x128xf32> to vector<1x128xf32>
    %42 = vector.broadcast %41 : vector<1x128xf32> to vector<8x128xf32>
    %43 = arith.addf %38, %42 : vector<8x128xf32>
    %44 = arith.index_cast %c0_i32 : i32 to index
    %c0_21 = arith.constant 0 : index
    %c0_22 = arith.constant 0 : index
    %45 = vector.load %arg8[%44, %c0_21, %c0_22] : memref<2x1x128xf32, #tpu.memory_space<vmem>>, vector<1x1x128xf32>
    %46 = vector.shape_cast %45 : vector<1x1x128xf32> to vector<1x128xf32>
    %47 = arith.index_cast %c0_i32 : i32 to index
    %c0_23 = arith.constant 0 : index
    %c0_24 = arith.constant 0 : index
    %48 = vector.load %arg9[%47, %c0_23, %c0_24] : memref<2x1x128xf32, #tpu.memory_space<vmem>>, vector<1x1x128xf32>
    %49 = vector.shape_cast %48 : vector<1x1x128xf32> to vector<1x128xf32>
    %cst_25 = arith.constant 0.000000e+00 : f32
    %50 = vector.broadcast %cst_25 : f32 to vector<8x128xf32>
    %51 = arith.maximumf %43, %50 : vector<8x128xf32>
    %cst_26 = arith.constant dense<0.000000e+00> : vector<8xf32>
    %52 = vector.multi_reduction <add>, %51, %cst_26 [1] : vector<8x128xf32> to vector<8xf32>
    %53 = vector.shape_cast %52 : vector<8xf32> to vector<8x1xf32>
    %cst_27 = arith.constant 3.125000e-02 : f32
    %54 = vector.broadcast %cst_27 : f32 to vector<8x1xf32>
    %55 = arith.mulf %53, %54 : vector<8x1xf32>
    %56 = arith.mulf %51, %51 : vector<8x128xf32>
    %cst_28 = arith.constant dense<0.000000e+00> : vector<8xf32>
    %57 = vector.multi_reduction <add>, %56, %cst_28 [1] : vector<8x128xf32> to vector<8xf32>
    %58 = vector.shape_cast %57 : vector<8xf32> to vector<8x1xf32>
    %cst_29 = arith.constant 3.125000e-02 : f32
    %59 = vector.broadcast %cst_29 : f32 to vector<8x1xf32>
    %60 = arith.mulf %58, %59 : vector<8x1xf32>
    %61 = arith.mulf %55, %55 : vector<8x1xf32>
    %62 = arith.subf %60, %61 : vector<8x1xf32>
    %cst_30 = arith.constant 0.000000e+00 : f32
    %63 = vector.broadcast %cst_30 : f32 to vector<8x1xf32>
    %64 = arith.maximumf %62, %63 : vector<8x1xf32>
    %65 = vector.broadcast %55 : vector<8x1xf32> to vector<8x128xf32>
    %66 = arith.subf %51, %65 : vector<8x128xf32>
    %cst_31 = arith.constant 9.99999974E-6 : f32
    %67 = vector.broadcast %cst_31 : f32 to vector<8x1xf32>
    %68 = arith.addf %64, %67 : vector<8x1xf32>
    %69 = math.rsqrt %68 : vector<8x1xf32>
    %70 = vector.broadcast %69 : vector<8x1xf32> to vector<8x128xf32>
    %71 = arith.mulf %66, %70 : vector<8x128xf32>
    %72 = vector.broadcast %46 : vector<1x128xf32> to vector<8x128xf32>
    %73 = arith.mulf %71, %72 : vector<8x128xf32>
    %74 = vector.broadcast %49 : vector<1x128xf32> to vector<8x128xf32>
    %75 = arith.addf %73, %74 : vector<8x128xf32>
    %c1_i32 = arith.constant 1 : i32
    %76 = arith.truncf %75 : vector<8x128xf32> to vector<8x128xbf16>
    %77 = arith.index_cast %c1_i32 : i32 to index
    %c0_32 = arith.constant 0 : index
    %c0_33 = arith.constant 0 : index
    %78 = vector.load %arg6[%77, %c0_32, %c0_33] : memref<2x128x128xbf16, #tpu.memory_space<vmem>>, vector<1x128x128xbf16>
    %79 = vector.shape_cast %78 : vector<1x128x128xbf16> to vector<128x128xbf16>
    %cst_34 = arith.constant dense<0.000000e+00> : vector<8x128xf32>
    %80 = tpu.matmul %76, %79, %cst_34 {dimension_numbers = #tpu.dot_dimension_numbers<[1], [0], [0], [1], [0, 0, 1, 1], [], []>} : vector<8x128xbf16>, vector<128x128xbf16>, vector<8x128xf32> -> vector<8x128xf32>
    %81 = arith.index_cast %c1_i32 : i32 to index
    %c0_35 = arith.constant 0 : index
    %c0_36 = arith.constant 0 : index
    %82 = vector.load %arg7[%81, %c0_35, %c0_36] : memref<2x1x128xf32, #tpu.memory_space<vmem>>, vector<1x1x128xf32>
    %83 = vector.shape_cast %82 : vector<1x1x128xf32> to vector<1x128xf32>
    %84 = vector.broadcast %83 : vector<1x128xf32> to vector<8x128xf32>
    %85 = arith.addf %80, %84 : vector<8x128xf32>
    %86 = arith.index_cast %c1_i32 : i32 to index
    %c0_37 = arith.constant 0 : index
    %c0_38 = arith.constant 0 : index
    %87 = vector.load %arg8[%86, %c0_37, %c0_38] : memref<2x1x128xf32, #tpu.memory_space<vmem>>, vector<1x1x128xf32>
    %88 = vector.shape_cast %87 : vector<1x1x128xf32> to vector<1x128xf32>
    %89 = arith.index_cast %c1_i32 : i32 to index
    %c0_39 = arith.constant 0 : index
    %c0_40 = arith.constant 0 : index
    %90 = vector.load %arg9[%89, %c0_39, %c0_40] : memref<2x1x128xf32, #tpu.memory_space<vmem>>, vector<1x1x128xf32>
    %91 = vector.shape_cast %90 : vector<1x1x128xf32> to vector<1x128xf32>
    %cst_41 = arith.constant 0.000000e+00 : f32
    %92 = vector.broadcast %cst_41 : f32 to vector<8x128xf32>
    %93 = arith.maximumf %85, %92 : vector<8x128xf32>
    %cst_42 = arith.constant dense<0.000000e+00> : vector<8xf32>
    %94 = vector.multi_reduction <add>, %93, %cst_42 [1] : vector<8x128xf32> to vector<8xf32>
    %95 = vector.shape_cast %94 : vector<8xf32> to vector<8x1xf32>
    %cst_43 = arith.constant 3.125000e-02 : f32
    %96 = vector.broadcast %cst_43 : f32 to vector<8x1xf32>
    %97 = arith.mulf %95, %96 : vector<8x1xf32>
    %98 = arith.mulf %93, %93 : vector<8x128xf32>
    %cst_44 = arith.constant dense<0.000000e+00> : vector<8xf32>
    %99 = vector.multi_reduction <add>, %98, %cst_44 [1] : vector<8x128xf32> to vector<8xf32>
    %100 = vector.shape_cast %99 : vector<8xf32> to vector<8x1xf32>
    %cst_45 = arith.constant 3.125000e-02 : f32
    %101 = vector.broadcast %cst_45 : f32 to vector<8x1xf32>
    %102 = arith.mulf %100, %101 : vector<8x1xf32>
    %103 = arith.mulf %97, %97 : vector<8x1xf32>
    %104 = arith.subf %102, %103 : vector<8x1xf32>
    %cst_46 = arith.constant 0.000000e+00 : f32
    %105 = vector.broadcast %cst_46 : f32 to vector<8x1xf32>
    %106 = arith.maximumf %104, %105 : vector<8x1xf32>
    %107 = vector.broadcast %97 : vector<8x1xf32> to vector<8x128xf32>
    %108 = arith.subf %93, %107 : vector<8x128xf32>
    %cst_47 = arith.constant 9.99999974E-6 : f32
    %109 = vector.broadcast %cst_47 : f32 to vector<8x1xf32>
    %110 = arith.addf %106, %109 : vector<8x1xf32>
    %111 = math.rsqrt %110 : vector<8x1xf32>
    %112 = vector.broadcast %111 : vector<8x1xf32> to vector<8x128xf32>
    %113 = arith.mulf %108, %112 : vector<8x128xf32>
    %114 = vector.broadcast %88 : vector<1x128xf32> to vector<8x128xf32>
    %115 = arith.mulf %113, %114 : vector<8x128xf32>
    %116 = vector.broadcast %91 : vector<1x128xf32> to vector<8x128xf32>
    %117 = arith.addf %115, %116 : vector<8x128xf32>
    %c2_i32 = arith.constant 2 : i32
    %118 = arith.truncf %117 : vector<8x128xf32> to vector<8x128xbf16>
    %c0_48 = arith.constant 0 : index
    %c0_49 = arith.constant 0 : index
    %119 = vector.load %arg10[%c0_48, %c0_49] : memref<128x128xbf16, #tpu.memory_space<vmem>>, vector<128x128xbf16>
    %cst_50 = arith.constant dense<0.000000e+00> : vector<8x128xf32>
    %120 = tpu.matmul %118, %119, %cst_50 {dimension_numbers = #tpu.dot_dimension_numbers<[1], [0], [0], [1], [0, 0, 1, 1], [], []>} : vector<8x128xbf16>, vector<128x128xbf16>, vector<8x128xf32> -> vector<8x128xf32>
    %c0_51 = arith.constant 0 : index
    %c0_52 = arith.constant 0 : index
    %121 = vector.load %arg11[%c0_51, %c0_52] : memref<1x128xf32, #tpu.memory_space<vmem>>, vector<1x128xf32>
    %122 = vector.broadcast %121 : vector<1x128xf32> to vector<8x128xf32>
    %123 = arith.addf %120, %122 : vector<8x128xf32>
    %c0_53 = arith.constant 0 : index
    %c0_54 = arith.constant 0 : index
    %124 = vector.load %arg12[%c0_53, %c0_54] : memref<8x128xf32, #tpu.memory_space<vmem>>, vector<8x128xf32>
    tpu.vector_store %arg12[%c0_53, %c0_54], %123 {strides = array<i32>} : memref<8x128xf32, #tpu.memory_space<vmem>>, vector<8x128xf32>,
    return
  }
  func.func @transform_0(%arg0: i32) -> (i32, i32) {
    %c0_i32 = arith.constant 0 : i32
    %c0_i32_0 = arith.constant 0 : i32
    return %arg0, %c0_i32 : i32, i32
  }
  func.func @transform_1(%arg0: i32) -> (i32, i32) {
    %c0_i32 = arith.constant 0 : i32
    %c0_i32_0 = arith.constant 0 : i32
    %c0_i32_1 = arith.constant 0 : i32
    return %c0_i32, %c0_i32_0 : i32, i32
  }
  func.func @transform_2(%arg0: i32) -> (i32, i32) {
    %c0_i32 = arith.constant 0 : i32
    %c0_i32_0 = arith.constant 0 : i32
    %c0_i32_1 = arith.constant 0 : i32
    return %c0_i32, %c0_i32_0 : i32, i32
  }
  func.func @transform_3(%arg0: i32) -> (i32, i32) {
    %c0_i32 = arith.constant 0 : i32
    %c0_i32_0 = arith.constant 0 : i32
    %c0_i32_1 = arith.constant 0 : i32
    return %c0_i32, %c0_i32_0 : i32, i32
  }
  func.func @transform_4(%arg0: i32) -> (i32, i32) {
    %c0_i32 = arith.constant 0 : i32
    %c0_i32_0 = arith.constant 0 : i32
    %c0_i32_1 = arith.constant 0 : i32
    return %c0_i32, %c0_i32_0 : i32, i32
  }
  func.func @transform_5(%arg0: i32) -> (i32, i32, i32) {
    %c0_i32 = arith.constant 0 : i32
    %c0_i32_0 = arith.constant 0 : i32
    %c0_i32_1 = arith.constant 0 : i32
    %c0_i32_2 = arith.constant 0 : i32
    return %c0_i32, %c0_i32_0, %c0_i32_1 : i32, i32, i32
  }
  func.func @transform_6(%arg0: i32) -> (i32, i32, i32) {
    %c0_i32 = arith.constant 0 : i32
    %c0_i32_0 = arith.constant 0 : i32
    %c0_i32_1 = arith.constant 0 : i32
    %c0_i32_2 = arith.constant 0 : i32
    return %c0_i32, %c0_i32_0, %c0_i32_1 : i32, i32, i32
  }
  func.func @transform_7(%arg0: i32) -> (i32, i32, i32) {
    %c0_i32 = arith.constant 0 : i32
    %c0_i32_0 = arith.constant 0 : i32
    %c0_i32_1 = arith.constant 0 : i32
    %c0_i32_2 = arith.constant 0 : i32
    return %c0_i32, %c0_i32_0, %c0_i32_1 : i32, i32, i32
  }
  func.func @transform_8(%arg0: i32) -> (i32, i32, i32) {
    %c0_i32 = arith.constant 0 : i32
    %c0_i32_0 = arith.constant 0 : i32
    %c0_i32_1 = arith.constant 0 : i32
    %c0_i32_2 = arith.constant 0 : i32
    return %c0_i32, %c0_i32_0, %c0_i32_1 : i32, i32, i32
  }
  func.func @transform_9(%arg0: i32) -> (i32, i32) {
    %c0_i32 = arith.constant 0 : i32
    %c0_i32_0 = arith.constant 0 : i32
    %c0_i32_1 = arith.constant 0 : i32
    return %c0_i32, %c0_i32_0 : i32, i32
  }
  func.func @transform_10(%arg0: i32) -> (i32, i32) {
    %c0_i32 = arith.constant 0 : i32
    %c0_i32_0 = arith.constant 0 : i32
    %c0_i32_1 = arith.constant 0 : i32
    return %c0_i32, %c0_i32_0 : i32, i32
  }
  func.func @transform_11(%arg0: i32) -> (i32, i32) {
    %c0_i32 = arith.constant 0 : i32
    %c0_i32_0 = arith.constant 0 : i32
    return %arg0, %c0_i32 : i32, i32
  }
}

module attributes {stable_mosaic.version = 11 : i64} {
  func.func @_mlp_fused_kernel(%arg0: i32, %arg1: memref<8x128xbf16, #tpu.memory_space<vmem>>, %arg2: memref<128x128xbf16, #tpu.memory_space<vmem>>, %arg3: memref<1x128xf32, #tpu.memory_space<vmem>>, %arg4: memref<1x128xf32, #tpu.memory_space<vmem>>, %arg5: memref<1x128xf32, #tpu.memory_space<vmem>>, %arg6: memref<2x128x128xbf16, #tpu.memory_space<vmem>>, %arg7: memref<2x1x128xf32, #tpu.memory_space<vmem>>, %arg8: memref<2x1x128xf32, #tpu.memory_space<vmem>>, %arg9: memref<2x1x128xf32, #tpu.memory_space<vmem>>, %arg10: memref<128x128xbf16, #tpu.memory_space<vmem>>, %arg11: memref<1x128xf32, #tpu.memory_space<vmem>>, %arg12: memref<8x128xf32, #tpu.memory_space<vmem>>) attributes {dimension_semantics = [#tpu.dimension_semantics<parallel>], iteration_bounds = array<i64: 1>, scalar_prefetch = 0 : i64, scratch_operands = 0 : i64, tpu.core_type = #tpu.core_type<tc>, window_params = [{transform_indices = @transform_0, window_bounds = array<i64: 8, 128>}, {pipeline_mode = #tpu.pipeline_mode<synchronous>, transform_indices = @transform_1, window_bounds = array<i64: 128, 128>}, {pipeline_mode = #tpu.pipeline_mode<synchronous>, transform_indices = @transform_2, window_bounds = array<i64: 1, 128>}, {pipeline_mode = #tpu.pipeline_mode<synchronous>, transform_indices = @transform_3, window_bounds = array<i64: 1, 128>}, {pipeline_mode = #tpu.pipeline_mode<synchronous>, transform_indices = @transform_4, window_bounds = array<i64: 1, 128>}, {pipeline_mode = #tpu.pipeline_mode<synchronous>, transform_indices = @transform_5, window_bounds = array<i64: 2, 128, 128>}, {pipeline_mode = #tpu.pipeline_mode<synchronous>, transform_indices = @transform_6, window_bounds = array<i64: 2, 1, 128>}, {pipeline_mode = #tpu.pipeline_mode<synchronous>, transform_indices = @transform_7, window_bounds = array<i64: 2, 1, 128>}, {pipeline_mode = #tpu.pipeline_mode<synchronous>, transform_indices = @transform_8, window_bounds = array<i64: 2, 1, 128>}, {pipeline_mode = #tpu.pipeline_mode<synchronous>, transform_indices = @transform_9, window_bounds = array<i64: 128, 128>}, {pipeline_mode = #tpu.pipeline_mode<synchronous>, transform_indices = @transform_10, window_bounds = array<i64: 1, 128>}, {transform_indices = @transform_11, window_bounds = array<i64: 8, 128>}]} {
    %c0 = arith.constant 0 : index
    %c0_0 = arith.constant 0 : index
    %0 = vector.load %arg1[%c0, %c0_0] : memref<8x128xbf16, #tpu.memory_space<vmem>>, vector<8x128xbf16>
    %c0_1 = arith.constant 0 : index
    %c0_2 = arith.constant 0 : index
    %1 = vector.load %arg2[%c0_1, %c0_2] : memref<128x128xbf16, #tpu.memory_space<vmem>>, vector<128x128xbf16>
    %cst = arith.constant dense<0.000000e+00> : vector<8x128xf32>
    %2 = tpu.matmul %0, %1, %cst {dimension_numbers = #tpu.dot_dimension_numbers<[1], [0], [0], [1], [0, 0, 1, 1], [], []>} : vector<8x128xbf16>, vector<128x128xbf16>, vector<8x128xf32> -> vector<8x128xf32>
    %c0_3 = arith.constant 0 : index
    %c0_4 = arith.constant 0 : index
    %3 = vector.load %arg3[%c0_3, %c0_4] : memref<1x128xf32, #tpu.memory_space<vmem>>, vector<1x128xf32>
    %4 = vector.broadcast %3 : vector<1x128xf32> to vector<8x128xf32>
    %5 = arith.addf %2, %4 : vector<8x128xf32>
    %c0_5 = arith.constant 0 : index
    %c0_6 = arith.constant 0 : index
    %6 = vector.load %arg4[%c0_5, %c0_6] : memref<1x128xf32, #tpu.memory_space<vmem>>, vector<1x128xf32>
    %c0_7 = arith.constant 0 : index
    %c0_8 = arith.constant 0 : index
    %7 = vector.load %arg5[%c0_7, %c0_8] : memref<1x128xf32, #tpu.memory_space<vmem>>, vector<1x128xf32>
    %cst_9 = arith.constant 0.000000e+00 : f32
    %8 = vector.broadcast %cst_9 : f32 to vector<8x128xf32>
    %9 = arith.maximumf %5, %8 : vector<8x128xf32>
    %cst_10 = arith.constant dense<0.000000e+00> : vector<8xf32>
    %10 = vector.multi_reduction <add>, %9, %cst_10 [1] : vector<8x128xf32> to vector<8xf32>
    %11 = vector.shape_cast %10 : vector<8xf32> to vector<8x1xf32>
    %cst_11 = arith.constant 3.125000e-02 : f32
    %12 = vector.broadcast %cst_11 : f32 to vector<8x1xf32>
    %13 = arith.mulf %11, %12 : vector<8x1xf32>
    %14 = arith.mulf %9, %9 : vector<8x128xf32>
    %cst_12 = arith.constant dense<0.000000e+00> : vector<8xf32>
    %15 = vector.multi_reduction <add>, %14, %cst_12 [1] : vector<8x128xf32> to vector<8xf32>
    %16 = vector.shape_cast %15 : vector<8xf32> to vector<8x1xf32>
    %cst_13 = arith.constant 3.125000e-02 : f32
    %17 = vector.broadcast %cst_13 : f32 to vector<8x1xf32>
    %18 = arith.mulf %16, %17 : vector<8x1xf32>
    %19 = arith.mulf %13, %13 : vector<8x1xf32>
    %20 = arith.subf %18, %19 : vector<8x1xf32>
    %cst_14 = arith.constant 0.000000e+00 : f32
    %21 = vector.broadcast %cst_14 : f32 to vector<8x1xf32>
    %22 = arith.maximumf %20, %21 : vector<8x1xf32>
    %23 = vector.broadcast %13 : vector<8x1xf32> to vector<8x128xf32>
    %24 = arith.subf %9, %23 : vector<8x128xf32>
    %cst_15 = arith.constant 9.99999974E-6 : f32
    %25 = vector.broadcast %cst_15 : f32 to vector<8x1xf32>
    %26 = arith.addf %22, %25 : vector<8x1xf32>
    %27 = math.rsqrt %26 : vector<8x1xf32>
    %28 = vector.broadcast %27 : vector<8x1xf32> to vector<8x128xf32>
    %29 = arith.mulf %24, %28 : vector<8x128xf32>
    %30 = vector.broadcast %6 : vector<1x128xf32> to vector<8x128xf32>
    %31 = arith.mulf %29, %30 : vector<8x128xf32>
    %32 = vector.broadcast %7 : vector<1x128xf32> to vector<8x128xf32>
    %33 = arith.addf %31, %32 : vector<8x128xf32>
    %c0_i32 = arith.constant 0 : i32
    %34 = arith.truncf %33 : vector<8x128xf32> to vector<8x128xbf16>
    %35 = arith.index_cast %c0_i32 : i32 to index
    %c0_16 = arith.constant 0 : index
    %c0_17 = arith.constant 0 : index
    %36 = vector.load %arg6[%35, %c0_16, %c0_17] : memref<2x128x128xbf16, #tpu.memory_space<vmem>>, vector<1x128x128xbf16>
    %37 = vector.shape_cast %36 : vector<1x128x128xbf16> to vector<128x128xbf16>
    %cst_18 = arith.constant dense<0.000000e+00> : vector<8x128xf32>
    %38 = tpu.matmul %34, %37, %cst_18 {dimension_numbers = #tpu.dot_dimension_numbers<[1], [0], [0], [1], [0, 0, 1, 1], [], []>} : vector<8x128xbf16>, vector<128x128xbf16>, vector<8x128xf32> -> vector<8x128xf32>
    %39 = arith.index_cast %c0_i32 : i32 to index
    %c0_19 = arith.constant 0 : index
    %c0_20 = arith.constant 0 : index
    %40 = vector.load %arg7[%39, %c0_19, %c0_20] : memref<2x1x128xf32, #tpu.memory_space<vmem>>, vector<1x1x128xf32>
    %41 = vector.shape_cast %40 : vector<1x1x128xf32> to vector<1x128xf32>
    %42 = vector.broadcast %41 : vector<1x128xf32> to vector<8x128xf32>
    %43 = arith.addf %38, %42 : vector<8x128xf32>
    %44 = arith.index_cast %c0_i32 : i32 to index
    %c0_21 = arith.constant 0 : index
    %c0_22 = arith.constant 0 : index
    %45 = vector.load %arg8[%44, %c0_21, %c0_22] : memref<2x1x128xf32, #tpu.memory_space<vmem>>, vector<1x1x128xf32>
    %46 = vector.shape_cast %45 : vector<1x1x128xf32> to vector<1x128xf32>
    %47 = arith.index_cast %c0_i32 : i32 to index
    %c0_23 = arith.constant 0 : index
    %c0_24 = arith.constant 0 : index
    %48 = vector.load %arg9[%47, %c0_23, %c0_24] : memref<2x1x128xf32, #tpu.memory_space<vmem>>, vector<1x1x128xf32>
    %49 = vector.shape_cast %48 : vector<1x1x128xf32> to vector<1x128xf32>
    %cst_25 = arith.constant 0.000000e+00 : f32
    %50 = vector.broadcast %cst_25 : f32 to vector<8x128xf32>
    %51 = arith.maximumf %43, %50 : vector<8x128xf32>
    %cst_26 = arith.constant dense<0.000000e+00> : vector<8xf32>
    %52 = vector.multi_reduction <add>, %51, %cst_26 [1] : vector<8x128xf32> to vector<8xf32>
    %53 = vector.shape_cast %52 : vector<8xf32> to vector<8x1xf32>
    %cst_27 = arith.constant 3.125000e-02 : f32
    %54 = vector.broadcast %cst_27 : f32 to vector<8x1xf32>
    %55 = arith.mulf %53, %54 : vector<8x1xf32>
    %56 = arith.mulf %51, %51 : vector<8x128xf32>
    %cst_28 = arith.constant dense<0.000000e+00> : vector<8xf32>
    %57 = vector.multi_reduction <add>, %56, %cst_28 [1] : vector<8x128xf32> to vector<8xf32>
    %58 = vector.shape_cast %57 : vector<8xf32> to vector<8x1xf32>
    %cst_29 = arith.constant 3.125000e-02 : f32
    %59 = vector.broadcast %cst_29 : f32 to vector<8x1xf32>
    %60 = arith.mulf %58, %59 : vector<8x1xf32>
    %61 = arith.mulf %55, %55 : vector<8x1xf32>
    %62 = arith.subf %60, %61 : vector<8x1xf32>
    %cst_30 = arith.constant 0.000000e+00 : f32
    %63 = vector.broadcast %cst_30 : f32 to vector<8x1xf32>
    %64 = arith.maximumf %62, %63 : vector<8x1xf32>
    %65 = vector.broadcast %55 : vector<8x1xf32> to vector<8x128xf32>
    %66 = arith.subf %51, %65 : vector<8x128xf32>
    %cst_31 = arith.constant 9.99999974E-6 : f32
    %67 = vector.broadcast %cst_31 : f32 to vector<8x1xf32>
    %68 = arith.addf %64, %67 : vector<8x1xf32>
    %69 = math.rsqrt %68 : vector<8x1xf32>
    %70 = vector.broadcast %69 : vector<8x1xf32> to vector<8x128xf32>
    %71 = arith.mulf %66, %70 : vector<8x128xf32>
    %72 = vector.broadcast %46 : vector<1x128xf32> to vector<8x128xf32>
    %73 = arith.mulf %71, %72 : vector<8x128xf32>
    %74 = vector.broadcast %49 : vector<1x128xf32> to vector<8x128xf32>
    %75 = arith.addf %73, %74 : vector<8x128xf32>
    %c1_i32 = arith.constant 1 : i32
    %76 = arith.truncf %75 : vector<8x128xf32> to vector<8x128xbf16>
    %77 = arith.index_cast %c1_i32 : i32 to index
    %c0_32 = arith.constant 0 : index
    %c0_33 = arith.constant 0 : index
    %78 = vector.load %arg6[%77, %c0_32, %c0_33] : memref<2x128x128xbf16, #tpu.memory_space<vmem>>, vector<1x128x128xbf16>
    %79 = vector.shape_cast %78 : vector<1x128x128xbf16> to vector<128x128xbf16>
    %cst_34 = arith.constant dense<0.000000e+00> : vector<8x128xf32>
    %80 = tpu.matmul %76, %79, %cst_34 {dimension_numbers = #tpu.dot_dimension_numbers<[1], [0], [0], [1], [0, 0, 1, 1], [], []>} : vector<8x128xbf16>, vector<128x128xbf16>, vector<8x128xf32> -> vector<8x128xf32>
    %81 = arith.index_cast %c1_i32 : i32 to index
    %c0_35 = arith.constant 0 : index
    %c0_36 = arith.constant 0 : index
    %82 = vector.load %arg7[%81, %c0_35, %c0_36] : memref<2x1x128xf32, #tpu.memory_space<vmem>>, vector<1x1x128xf32>
    %83 = vector.shape_cast %82 : vector<1x1x128xf32> to vector<1x128xf32>
    %84 = vector.broadcast %83 : vector<1x128xf32> to vector<8x128xf32>
    %85 = arith.addf %80, %84 : vector<8x128xf32>
    %86 = arith.index_cast %c1_i32 : i32 to index
    %c0_37 = arith.constant 0 : index
    %c0_38 = arith.constant 0 : index
    %87 = vector.load %arg8[%86, %c0_37, %c0_38] : memref<2x1x128xf32, #tpu.memory_space<vmem>>, vector<1x1x128xf32>
    %88 = vector.shape_cast %87 : vector<1x1x128xf32> to vector<1x128xf32>
    %89 = arith.index_cast %c1_i32 : i32 to index
    %c0_39 = arith.constant 0 : index
    %c0_40 = arith.constant 0 : index
    %90 = vector.load %arg9[%89, %c0_39, %c0_40] : memref<2x1x128xf32, #tpu.memory_space<vmem>>, vector<1x1x128xf32>
    %91 = vector.shape_cast %90 : vector<1x1x128xf32> to vector<1x128xf32>
    %cst_41 = arith.constant 0.000000e+00 : f32
    %92 = vector.broadcast %cst_41 : f32 to vector<8x128xf32>
    %93 = arith.maximumf %85, %92 : vector<8x128xf32>
    %cst_42 = arith.constant dense<0.000000e+00> : vector<8xf32>
    %94 = vector.multi_reduction <add>, %93, %cst_42 [1] : vector<8x128xf32> to vector<8xf32>
    %95 = vector.shape_cast %94 : vector<8xf32> to vector<8x1xf32>
    %cst_43 = arith.constant 3.125000e-02 : f32
    %96 = vector.broadcast %cst_43 : f32 to vector<8x1xf32>
    %97 = arith.mulf %95, %96 : vector<8x1xf32>
    %98 = arith.mulf %93, %93 : vector<8x128xf32>
    %cst_44 = arith.constant dense<0.000000e+00> : vector<8xf32>
    %99 = vector.multi_reduction <add>, %98, %cst_44 [1] : vector<8x128xf32> to vector<8xf32>
    %100 = vector.shape_cast %99 : vector<8xf32> to vector<8x1xf32>
    %cst_45 = arith.constant 3.125000e-02 : f32
    %101 = vector.broadcast %cst_45 : f32 to vector<8x1xf32>
    %102 = arith.mulf %100, %101 : vector<8x1xf32>
    %103 = arith.mulf %97, %97 : vector<8x1xf32>
    %104 = arith.subf %102, %103 : vector<8x1xf32>
    %cst_46 = arith.constant 0.000000e+00 : f32
    %105 = vector.broadcast %cst_46 : f32 to vector<8x1xf32>
    %106 = arith.maximumf %104, %105 : vector<8x1xf32>
    %107 = vector.broadcast %97 : vector<8x1xf32> to vector<8x128xf32>
    %108 = arith.subf %93, %107 : vector<8x128xf32>
    %cst_47 = arith.constant 9.99999974E-6 : f32
    %109 = vector.broadcast %cst_47 : f32 to vector<8x1xf32>
    %110 = arith.addf %106, %109 : vector<8x1xf32>
    %111 = math.rsqrt %110 : vector<8x1xf32>
    %112 = vector.broadcast %111 : vector<8x1xf32> to vector<8x128xf32>
    %113 = arith.mulf %108, %112 : vector<8x128xf32>
    %114 = vector.broadcast %88 : vector<1x128xf32> to vector<8x128xf32>
    %115 = arith.mulf %113, %114 : vector<8x128xf32>
    %116 = vector.broadcast %91 : vector<1x128xf32> to vector<8x128xf32>
    %117 = arith.addf %115, %116 : vector<8x128xf32>
    %c2_i32 = arith.constant 2 : i32
    %118 = arith.truncf %117 : vector<8x128xf32> to vector<8x128xbf16>
    %c0_48 = arith.constant 0 : index
    %c0_49 = arith.constant 0 : index
    %119 = vector.load %arg10[%c0_48, %c0_49] : memref<128x128xbf16, #tpu.memory_space<vmem>>, vector<128x128xbf16>
    %cst_50 = arith.constant dense<0.000000e+00> : vector<8x128xf32>
    %120 = tpu.matmul %118, %119, %cst_50 {dimension_numbers = #tpu.dot_dimension_numbers<[1], [0], [0], [1], [0, 0, 1, 1], [], []>} : vector<8x128xbf16>, vector<128x128xbf16>, vector<8x128xf32> -> vector<8x128xf32>
    %c0_51 = arith.constant 0 : index
    %c0_52 = arith.constant 0 : index
    %121 = vector.load %arg11[%c0_51, %c0_52] : memref<1x128xf32, #tpu.memory_space<vmem>>, vector<1x128xf32>
    %122 = vector.broadcast %121 : vector<1x128xf32> to vector<8x128xf32>
    %123 = arith.addf %120, %122 : vector<8x128xf32>
    %c0_53 = arith.constant 0 : index
    %c0_54 = arith.constant 0 : index
    %124 = vector.load %arg12[%c0_53, %c0_54] : memref<8x128xf32, #tpu.memory_space<vmem>>, vector<8x128xf32>
    tpu.vector_store %arg12[%c0_53, %c0_54], %123 {strides = array<i32>} : memref<8x128xf32, #tpu.memory_space<vmem>>, vector<8x128xf32>,
    return
  }
  func.func @transform_0(%arg0: i32) -> (i32, i32) {
    %c0_i32 = arith.constant 0 : i32
    %c0_i32_0 = arith.constant 0 : i32
    return %arg0, %c0_i32 : i32, i32
  }
  func.func @transform_1(%arg0: i32) -> (i32, i32) {
    %c0_i32 = arith.constant 0 : i32
    %c0_i32_0 = arith.constant 0 : i32
    %c0_i32_1 = arith.constant 0 : i32
    return %c0_i32, %c0_i32_0 : i32, i32
  }
  func.func @transform_2(%arg0: i32) -> (i32, i32) {
    %c0_i32 = arith.constant 0 : i32
    %c0_i32_0 = arith.constant 0 : i32
    %c0_i32_1 = arith.constant 0 : i32
    return %c0_i32, %c0_i32_0 : i32, i32
  }
  func.func @transform_3(%arg0: i32) -> (i32, i32) {
    %c0_i32 = arith.constant 0 : i32
    %c0_i32_0 = arith.constant 0 : i32
    %c0_i32_1 = arith.constant 0 : i32
    return %c0_i32, %c0_i32_0 : i32, i32
  }
  func.func @transform_4(%arg0: i32) -> (i32, i32) {
    %c0_i32 = arith.constant 0 : i32
    %c0_i32_0 = arith.constant 0 : i32
    %c0_i32_1 = arith.constant 0 : i32
    return %c0_i32, %c0_i32_0 : i32, i32
  }
  func.func @transform_5(%arg0: i32) -> (i32, i32, i32) {
    %c0_i32 = arith.constant 0 : i32
    %c0_i32_0 = arith.constant 0 : i32
    %c0_i32_1 = arith.constant 0 : i32
    %c0_i32_2 = arith.constant 0 : i32
    return %c0_i32, %c0_i32_0, %c0_i32_1 : i32, i32, i32
  }
  func.func @transform_6(%arg0: i32) -> (i32, i32, i32) {
    %c0_i32 = arith.constant 0 : i32
    %c0_i32_0 = arith.constant 0 : i32
    %c0_i32_1 = arith.constant 0 : i32
    %c0_i32_2 = arith.constant 0 : i32
    return %c0_i32, %c0_i32_0, %c0_i32_1 : i32, i32, i32
  }
  func.func @transform_7(%arg0: i32) -> (i32, i32, i32) {
    %c0_i32 = arith.constant 0 : i32
    %c0_i32_0 = arith.constant 0 : i32
    %c0_i32_1 = arith.constant 0 : i32
    %c0_i32_2 = arith.constant 0 : i32
    return %c0_i32, %c0_i32_0, %c0_i32_1 : i32, i32, i32
  }
  func.func @transform_8(%arg0: i32) -> (i32, i32, i32) {
    %c0_i32 = arith.constant 0 : i32
    %c0_i32_0 = arith.constant 0 : i32
    %c0_i32_1 = arith.constant 0 : i32
    %c0_i32_2 = arith.constant 0 : i32
    return %c0_i32, %c0_i32_0, %c0_i32_1 : i32, i32, i32
  }
  func.func @transform_9(%arg0: i32) -> (i32, i32) {
    %c0_i32 = arith.constant 0 : i32
    %c0_i32_0 = arith.constant 0 : i32
    %c0_i32_1 = arith.constant 0 : i32
    return %c0_i32, %c0_i32_0 : i32, i32
  }
  func.func @transform_10(%arg0: i32) -> (i32, i32) {
    %c0_i32 = arith.constant 0 : i32
    %c0_i32_0 = arith.constant 0 : i32
    %c0_i32_1 = arith.constant 0 : i32
    return %c0_i32, %c0_i32_0 : i32, i32
  }
  func.func @transform_11(%arg0: i32) -> (i32, i32) {
    %c0_i32 = arith.constant 0 : i32
    %c0_i32_0 = arith.constant 0 : i32
    return %arg0, %c0_i32 : i32, i32
  }
}

</mosaic_0001>

<llo_original>
// kernel: _mlp_forward_impl.1
$region0: #{_mlp_forward_impl.1}
  #allocation0 [shape = 'u32[]', space=smem, size = 0x4, offset = 0x4, fixed_abs, tag = 'smem constant byte address 0x4 - core index']
  #allocation1 [shape = 'u32[72,128]{1,0:T(1,128)}', space=vmem, size = 0x9000, scoped, tag = 'internal scratch']
  %s0 = inlined_call_operand.vmem [shape: bf16[8,128], index: 0, kind: input, shape index: {}]
  %s1 = inlined_call_operand.hbm [shape: bf16[128,128], index: 1, kind: input, shape index: {}]
  %s2 = inlined_call_operand.vmem [shape: f32[1,128], index: 2, kind: input, shape index: {}]
  %s3 = inlined_call_operand.vmem [shape: f32[1,128], index: 3, kind: input, shape index: {}]
  %s4 = inlined_call_operand.vmem [shape: f32[1,128], index: 4, kind: input, shape index: {}]
  %s5 = inlined_call_operand.hbm [shape: bf16[2,128,128], index: 5, kind: input, shape index: {}]
  %s6 = inlined_call_operand.vmem [shape: f32[2,1,128], index: 6, kind: input, shape index: {}]
  %s7 = inlined_call_operand.vmem [shape: f32[2,1,128], index: 7, kind: input, shape index: {}]
  %s8 = inlined_call_operand.vmem [shape: f32[2,1,128], index: 8, kind: input, shape index: {}]
  %s9 = inlined_call_operand.hbm [shape: bf16[128,128], index: 9, kind: input, shape index: {}]
  %s10 = inlined_call_operand.vmem [shape: f32[1,128], index: 10, kind: input, shape index: {}]
  %s11 = inlined_call_operand.hbm [shape: f32[8,128], index: 11, kind: output, shape index: {}]
  %s12 = sld [smem:[#allocation0]]
  $region66: #{_mlp_forward_impl.1} parent=0
    _
  %s14 = ssub.s32 1, %s12
  %s15 = scalar_select 0, %s14, %s12
  $region1: #{_mlp_forward_impl.1} parent=0
    #allocation2 [shape = 'u8[32768]{0}', space=vmem, size = 0x8000, scoped, tag = 'input window, operand 1, single buffered']
    #allocation3 [shape = 's32[1]{0}', space=sflag, size = 0x4, scoped, tag = 'scoped memory for _mlp_forward_impl.1']
    #allocation4 [shape = 's32[1]{0}', space=sflag, size = 0x4, scoped, tag = 'scoped memory for _mlp_forward_impl.1']
    #allocation5 [shape = 'u8[65536]{0}', space=vmem, size = 0x10000, scoped, tag = 'input window, operand 5, single buffered']
    #allocation6 [shape = 's32[1]{0}', space=sflag, size = 0x4, scoped, tag = 'scoped memory for _mlp_forward_impl.1']
    #allocation7 [shape = 'u8[32768]{0}', space=vmem, size = 0x8000, scoped, tag = 'input window, operand 9, single buffered']
    #allocation8 [shape = 'u8[4096]{0}', space=vmem, size = 0x1000, scoped, tag = 'output window, operand 0, single buffered']
    %16 = vsyncpa [#allocation3], 0
    %17 = vsyncpa [#allocation6], 0
    %18 = vsyncpa [#allocation4], 0
    // Predicated region
    $region2: #{_mlp_forward_impl.1} parent=1 // pred_check
      _
    $region3: #{_mlp_forward_impl.1} parent=1 // pred_check_branch
      %20 = sbr.rel (0) target = $region5
    $region4: #{_mlp_forward_impl.1} parent=1 // pred_region
      _
    $region5: #{_mlp_forward_impl.1} parent=1 // pred_fallthru
      _
    // Predicated region
    $region6: #{_mlp_forward_impl.1} parent=1 // pred_check
      _
    $region7: #{_mlp_forward_impl.1} parent=1 // pred_check_branch
      %22 = sbr.rel (0) target = $region9
    $region8: #{_mlp_forward_impl.1} parent=1 // pred_region
      %24 = vsyncadd [#allocation3], 0
      %s25 = sshll.u32 %s1, 4
      %s26 = int_to_ptr.hbm [resolvable:$true] %s25
      %s27 = sshll.u32 [#allocation2], 4
      %s28 = int_to_ptr.vmem [resolvable:$true] %s27
      %33 = dma.hbm_to_vmem [thread:$0]  %s26, 1024, %s28, [#allocation3], 64, 64, 4
    $region9: #{_mlp_forward_impl.1} parent=1 // pred_fallthru
      _
    // Predicated region
    $region10: #{_mlp_forward_impl.1} parent=1 // pred_check
      _
    $region11: #{_mlp_forward_impl.1} parent=1 // pred_check_branch
      %35 = sbr.rel (0) target = $region13
    $region12: #{_mlp_forward_impl.1} parent=1 // pred_region
      _
    $region13: #{_mlp_forward_impl.1} parent=1 // pred_fallthru
      _
    // Predicated region
    $region14: #{_mlp_forward_impl.1} parent=1 // pred_check
      _
    $region15: #{_mlp_forward_impl.1} parent=1 // pred_check_branch
      %37 = sbr.rel (0) target = $region17
    $region16: #{_mlp_forward_impl.1} parent=1 // pred_region
      _
    $region17: #{_mlp_forward_impl.1} parent=1 // pred_fallthru
      _
    // Predicated region
    $region18: #{_mlp_forward_impl.1} parent=1 // pred_check
      _
    $region19: #{_mlp_forward_impl.1} parent=1 // pred_check_branch
      %39 = sbr.rel (0) target = $region21
    $region20: #{_mlp_forward_impl.1} parent=1 // pred_region
      _
    $region21: #{_mlp_forward_impl.1} parent=1 // pred_fallthru
      _
    // Predicated region
    $region22: #{_mlp_forward_impl.1} parent=1 // pred_check
      _
    $region23: #{_mlp_forward_impl.1} parent=1 // pred_check_branch
      %41 = sbr.rel (0) target = $region25
    $region24: #{_mlp_forward_impl.1} parent=1 // pred_region
      %43 = vsyncadd [#allocation6], 0
      %s44 = sshll.u32 %s5, 4
      %s45 = int_to_ptr.hbm [resolvable:$true] %s44
      %s46 = sshll.u32 [#allocation5], 4
      %s47 = int_to_ptr.vmem [resolvable:$true] %s46
      %52 = dma.hbm_to_vmem [thread:$0]  %s45, 2048, %s47, [#allocation6], 64, 64, 4
    $region25: #{_mlp_forward_impl.1} parent=1 // pred_fallthru
      _
    // Predicated region
    $region26: #{_mlp_forward_impl.1} parent=1 // pred_check
      _
    $region27: #{_mlp_forward_impl.1} parent=1 // pred_check_branch
      %54 = sbr.rel (0) target = $region29
    $region28: #{_mlp_forward_impl.1} parent=1 // pred_region
      _
    $region29: #{_mlp_forward_impl.1} parent=1 // pred_fallthru
      _
    // Predicated region
    $region30: #{_mlp_forward_impl.1} parent=1 // pred_check
      _
    $region31: #{_mlp_forward_impl.1} parent=1 // pred_check_branch
      %56 = sbr.rel (0) target = $region33
    $region32: #{_mlp_forward_impl.1} parent=1 // pred_region
      _
    $region33: #{_mlp_forward_impl.1} parent=1 // pred_fallthru
      _
    // Predicated region
    $region34: #{_mlp_forward_impl.1} parent=1 // pred_check
      _
    $region35: #{_mlp_forward_impl.1} parent=1 // pred_check_branch
      %58 = sbr.rel (0) target = $region37
    $region36: #{_mlp_forward_impl.1} parent=1 // pred_region
      _
    $region37: #{_mlp_forward_impl.1} parent=1 // pred_fallthru
      _
    // Predicated region
    $region38: #{_mlp_forward_impl.1} parent=1 // pred_check
      _
    $region39: #{_mlp_forward_impl.1} parent=1 // pred_check_branch
      %60 = sbr.rel (0) target = $region41
    $region40: #{_mlp_forward_impl.1} parent=1 // pred_region
      %62 = vsyncadd [#allocation6], 0
      %s63 = sshll.u32 %s9, 4
      %s64 = int_to_ptr.hbm [resolvable:$true] %s63
      %s65 = sshll.u32 [#allocation7], 4
      %s66 = int_to_ptr.vmem [resolvable:$true] %s65
      %71 = dma.hbm_to_vmem [thread:$0]  %s64, 1024, %s66, [#allocation6], 64, 64, 4
    $region41: #{_mlp_forward_impl.1} parent=1 // pred_fallthru
      _
    // Predicated region
    $region42: #{_mlp_forward_impl.1} parent=1 // pred_check
      _
    $region43: #{_mlp_forward_impl.1} parent=1 // pred_check_branch
      %73 = sbr.rel (0) target = $region45
    $region44: #{_mlp_forward_impl.1} parent=1 // pred_region
      _
    $region45: #{_mlp_forward_impl.1} parent=1 // pred_fallthru
      _
    // Predicated region
    $region46: #{_mlp_forward_impl.1} parent=1 // pred_check
      _
    $region47: #{_mlp_forward_impl.1} parent=1 // pred_check_branch
      %75 = sbr.rel (0) target = $region49
    $region48: #{_mlp_forward_impl.1} parent=1 // pred_region
      %77 = dma.done [#allocation3], 1024
    $region49: #{_mlp_forward_impl.1} parent=1 // pred_fallthru
      _
    // Predicated region
    $region50: #{_mlp_forward_impl.1} parent=1 // pred_check
      _
    $region51: #{_mlp_forward_impl.1} parent=1 // pred_check_branch
      %79 = sbr.rel (0) target = $region53
    $region52: #{_mlp_forward_impl.1} parent=1 // pred_region
      %81 = dma.done [#allocation6], 2048
    $region53: #{_mlp_forward_impl.1} parent=1 // pred_fallthru
      _
    // Predicated region
    $region54: #{_mlp_forward_impl.1} parent=1 // pred_check
      _
    $region55: #{_mlp_forward_impl.1} parent=1 // pred_check_branch
      %83 = sbr.rel (0) target = $region57
    $region56: #{_mlp_forward_impl.1} parent=1 // pred_region
      %85 = dma.done [#allocation6], 1024
    $region57: #{_mlp_forward_impl.1} parent=1 // pred_fallthru
      _
    %v86 = vld [vmem:[%s0] sm:$0xf]
    %v87 = vld [vmem:[#allocation2] sm:$0xf]
    %v88 = vld [vmem:[#allocation2 + $0x4] sm:$0xf]
    %v89 = vld [vmem:[#allocation2 + $0x8] sm:$0xf]
    %v90 = vld [vmem:[#allocation2 + $0xc] sm:$0xf]
    %v91 = vld [vmem:[#allocation2 + $0x10] sm:$0xf]
    %v92 = vld [vmem:[#allocation2 + $0x14] sm:$0xf]
    %v93 = vld [vmem:[#allocation2 + $0x18] sm:$0xf]
    %v94 = vld [vmem:[#allocation2 + $0x1c] sm:$0xf]
    %v95 = vld [vmem:[#allocation2 + $0x20] sm:$0xf]
    %v96 = vld [vmem:[#allocation2 + $0x24] sm:$0xf]
    %v97 = vld [vmem:[#allocation2 + $0x28] sm:$0xf]
    %v98 = vld [vmem:[#allocation2 + $0x2c] sm:$0xf]
    %v99 = vld [vmem:[#allocation2 + $0x30] sm:$0xf]
    %v100 = vld [vmem:[#allocation2 + $0x34] sm:$0xf]
    %v101 = vld [vmem:[#allocation2 + $0x38] sm:$0xf]
    %v102 = vld [vmem:[#allocation2 + $0x3c] sm:$0xf]
    %v103 = vld [vmem:[%s2] sm:$0x1]
    %v105 = vperm.slane %v103, 0
    %v123 = vunpack.c.l.b16 %v87
    %v124 = vunpack.c.l.b16 %v88
    %v125 = vunpack.c.l.b16 %v89
    %v126 = vunpack.c.l.b16 %v90
    %v127 = vunpack.c.l.b16 %v91
    %v128 = vunpack.c.l.b16 %v92
    %v129 = vunpack.c.l.b16 %v93
    %v130 = vunpack.c.l.b16 %v94
    %v131 = vunpack.c.l.b16 %v95
    %v132 = vunpack.c.l.b16 %v96
    %v133 = vunpack.c.l.b16 %v97
    %v134 = vunpack.c.l.b16 %v98
    %v135 = vunpack.c.l.b16 %v99
    %v136 = vunpack.c.l.b16 %v100
    %v137 = vunpack.c.l.b16 %v101
    %v138 = vunpack.c.l.b16 %v102
    %v139 = vpack.c.b16 %v124, %v123
    %v140 = vpack.c.b16 %v126, %v125
    %v141 = vpack.c.b16 %v128, %v127
    %v142 = vpack.c.b16 %v130, %v129
    %v143 = vpack.c.b16 %v132, %v131
    %v144 = vpack.c.b16 %v134, %v133
    %v145 = vpack.c.b16 %v136, %v135
    %v146 = vpack.c.b16 %v138, %v137
    %155 = vmatpush.bf16.msra.mxu0 %v146
    %156 = vmatpush.bf16.msra.mxu0 %v145
    %157 = vmatpush.bf16.msra.mxu0 %v144
    %158 = vmatpush.bf16.msra.mxu0 %v143
    %159 = vmatpush.bf16.msra.mxu0 %v142
    %160 = vmatpush.bf16.msra.mxu0 %v141
    %161 = vmatpush.bf16.msra.mxu0 %v140
    %162 = vmatpush.bf16.msra.mxu0 %v139
    %163 = vmatmul.bf16.gmra.mxu0 %v86
    %v164 = vpop.f32.mrf.mxu0
    %v165 = vadd.f32 %v105, %v164
    %v166 = vpop.f32.mrf.mxu0
    %167 = vdwg.mxu0
    %v168 = vld [vmem:[%s3] sm:$0x1]
    %v169 = vld [vmem:[%s4] sm:$0x1]
    %v170 = vmax.f32 %v165, 0.0
    %171 = vadd.xlane.f32.xlu0 %v170
    %v172 = vpop.xlane.xlu0 %171
    %v173 = vmul.f32 %v172, 0.03125
    %v174 = vmul.f32 %v170, %v170
    %175 = vadd.xlane.f32.xlu0 %v174
    %v176 = vpop.xlane.xlu0 %175
    %v177 = vmul.f32 %v176, 0.03125
    %v178 = vmul.f32 %v173, %v173
    %v179 = vsub.f32 %v177, %v178
    %v180 = vmax.f32 %v179, 0.0
    %v181 = vsub.f32 %v170, %v173
    %v182 = vadd.f32 %v180, 1e-05
    %v183 = vrsqrt.pop %v182
    %v184 = vmul.f32 %v183, %v182
    %v185 = vmul.f32 %v184, %v183
    %v186 = vmul.f32 0.5, %v185
    %v187 = vsub.f32 1.5, %v186
    %v188 = vmul.f32 %v183, %v187
    %vm189 = vweird.f32 %v182
    %vm190 = vweird.f32 %v183
    %vm191 = vmor %vm189, %vm190
    %v192 = vsel %vm191, %v183, %v188
    %v193 = vmul.f32 %v181, %v192
    %v195 = vperm.slane %v168, 0
    %v197 = vmul.f32 %v193, %v195
    %v199 = vperm.slane %v169, 0
    %v201 = vadd.f32 %v197, %v199
    %v202 = vpack.c.bf16 %v201, %v201
    %v203 = vld [vmem:[#allocation5] sm:$0xf]
    %v204 = vld [vmem:[#allocation5 + $0x4] sm:$0xf]
    %v205 = vld [vmem:[#allocation5 + $0x8] sm:$0xf]
    %v206 = vld [vmem:[#allocation5 + $0xc] sm:$0xf]
    %v207 = vld [vmem:[#allocation5 + $0x10] sm:$0xf]
    %v208 = vld [vmem:[#allocation5 + $0x14] sm:$0xf]
    %v209 = vld [vmem:[#allocation5 + $0x18] sm:$0xf]
    %v210 = vld [vmem:[#allocation5 + $0x1c] sm:$0xf]
    %v211 = vld [vmem:[#allocation5 + $0x20] sm:$0xf]
    %v212 = vld [vmem:[#allocation5 + $0x24] sm:$0xf]
    %v213 = vld [vmem:[#allocation5 + $0x28] sm:$0xf]
    %v214 = vld [vmem:[#allocation5 + $0x2c] sm:$0xf]
    %v215 = vld [vmem:[#allocation5 + $0x30] sm:$0xf]
    %v216 = vld [vmem:[#allocation5 + $0x34] sm:$0xf]
    %v217 = vld [vmem:[#allocation5 + $0x38] sm:$0xf]
    %v218 = vld [vmem:[#allocation5 + $0x3c] sm:$0xf]
    %v219 = vld [vmem:[%s6] sm:$0x1]
    %v221 = vperm.slane %v219, 0
    %v239 = vunpack.c.l.b16 %v203
    %v240 = vunpack.c.l.b16 %v204
    %v241 = vunpack.c.l.b16 %v205
    %v242 = vunpack.c.l.b16 %v206
    %v243 = vunpack.c.l.b16 %v207
    %v244 = vunpack.c.l.b16 %v208
    %v245 = vunpack.c.l.b16 %v209
    %v246 = vunpack.c.l.b16 %v210
    %v247 = vunpack.c.l.b16 %v211
    %v248 = vunpack.c.l.b16 %v212
    %v249 = vunpack.c.l.b16 %v213
    %v250 = vunpack.c.l.b16 %v214
    %v251 = vunpack.c.l.b16 %v215
    %v252 = vunpack.c.l.b16 %v216
    %v253 = vunpack.c.l.b16 %v217
    %v254 = vunpack.c.l.b16 %v218
    %v255 = vpack.c.b16 %v240, %v239
    %v256 = vpack.c.b16 %v242, %v241
    %v257 = vpack.c.b16 %v244, %v243
    %v258 = vpack.c.b16 %v246, %v245
    %v259 = vpack.c.b16 %v248, %v247
    %v260 = vpack.c.b16 %v250, %v249
    %v261 = vpack.c.b16 %v252, %v251
    %v262 = vpack.c.b16 %v254, %v253
    %271 = vmatpush.bf16.msra.mxu0 %v262
    %272 = vmatpush.bf16.msra.mxu0 %v261
    %273 = vmatpush.bf16.msra.mxu0 %v260
    %274 = vmatpush.bf16.msra.mxu0 %v259
    %275 = vmatpush.bf16.msra.mxu0 %v258
    %276 = vmatpush.bf16.msra.mxu0 %v257
    %277 = vmatpush.bf16.msra.mxu0 %v256
    %278 = vmatpush.bf16.msra.mxu0 %v255
    %279 = vmatmul.bf16.gmra.mxu0 %v202
    %v280 = vpop.f32.mrf.mxu0
    %v281 = vadd.f32 %v221, %v280
    %v282 = vpop.f32.mrf.mxu0
    %283 = vdwg.mxu0
    %v284 = vld [vmem:[%s7] sm:$0x1]
    %v285 = vld [vmem:[%s8] sm:$0x1]
    %v286 = vmax.f32 %v281, 0.0
    %287 = vadd.xlane.f32.xlu0 %v286
    %v288 = vpop.xlane.xlu0 %287
    %v289 = vmul.f32 %v288, 0.03125
    %v290 = vmul.f32 %v286, %v286
    %291 = vadd.xlane.f32.xlu0 %v290
    %v292 = vpop.xlane.xlu0 %291
    %v293 = vmul.f32 %v292, 0.03125
    %v294 = vmul.f32 %v289, %v289
    %v295 = vsub.f32 %v293, %v294
    %v296 = vmax.f32 %v295, 0.0
    %v297 = vsub.f32 %v286, %v289
    %v298 = vadd.f32 %v296, 1e-05
    %v299 = vrsqrt.pop %v298
    %v300 = vmul.f32 %v299, %v298
    %v301 = vmul.f32 %v300, %v299
    %v302 = vmul.f32 0.5, %v301
    %v303 = vsub.f32 1.5, %v302
    %v304 = vmul.f32 %v299, %v303
    %vm305 = vweird.f32 %v298
    %vm306 = vweird.f32 %v299
    %vm307 = vmor %vm305, %vm306
    %v308 = vsel %vm307, %v299, %v304
    %v309 = vmul.f32 %v297, %v308
    %v311 = vperm.slane %v284, 0
    %v313 = vmul.f32 %v309, %v311
    %v315 = vperm.slane %v285, 0
    %v317 = vadd.f32 %v313, %v315
    %v318 = vpack.c.bf16 %v317, %v317
    %s319 = scalar_lea.vmem [#allocation5], 64
    %v320 = vld [vmem:[%s319] sm:$0xf]
    %v321 = vld [vmem:[%s319 + $0x4] sm:$0xf]
    %v322 = vld [vmem:[%s319 + $0x8] sm:$0xf]
    %v323 = vld [vmem:[%s319 + $0xc] sm:$0xf]
    %v324 = vld [vmem:[%s319 + $0x10] sm:$0xf]
    %v325 = vld [vmem:[%s319 + $0x14] sm:$0xf]
    %v326 = vld [vmem:[%s319 + $0x18] sm:$0xf]
    %v327 = vld [vmem:[%s319 + $0x1c] sm:$0xf]
    %v328 = vld [vmem:[%s319 + $0x20] sm:$0xf]
    %v329 = vld [vmem:[%s319 + $0x24] sm:$0xf]
    %v330 = vld [vmem:[%s319 + $0x28] sm:$0xf]
    %v331 = vld [vmem:[%s319 + $0x2c] sm:$0xf]
    %v332 = vld [vmem:[%s319 + $0x30] sm:$0xf]
    %v333 = vld [vmem:[%s319 + $0x34] sm:$0xf]
    %v334 = vld [vmem:[%s319 + $0x38] sm:$0xf]
    %v335 = vld [vmem:[%s319 + $0x3c] sm:$0xf]
    %s336 = scalar_lea.vmem %s6, 1
    %v337 = vld [vmem:[%s336] sm:$0x1]
    %v339 = vperm.slane %v337, 0
    %v357 = vunpack.c.l.b16 %v320
    %v358 = vunpack.c.l.b16 %v321
    %v359 = vunpack.c.l.b16 %v322
    %v360 = vunpack.c.l.b16 %v323
    %v361 = vunpack.c.l.b16 %v324
    %v362 = vunpack.c.l.b16 %v325
    %v363 = vunpack.c.l.b16 %v326
    %v364 = vunpack.c.l.b16 %v327
    %v365 = vunpack.c.l.b16 %v328
    %v366 = vunpack.c.l.b16 %v329
    %v367 = vunpack.c.l.b16 %v330
    %v368 = vunpack.c.l.b16 %v331
    %v369 = vunpack.c.l.b16 %v332
    %v370 = vunpack.c.l.b16 %v333
    %v371 = vunpack.c.l.b16 %v334
    %v372 = vunpack.c.l.b16 %v335
    %v373 = vpack.c.b16 %v358, %v357
    %v374 = vpack.c.b16 %v360, %v359
    %v375 = vpack.c.b16 %v362, %v361
    %v376 = vpack.c.b16 %v364, %v363
    %v377 = vpack.c.b16 %v366, %v365
    %v378 = vpack.c.b16 %v368, %v367
    %v379 = vpack.c.b16 %v370, %v369
    %v380 = vpack.c.b16 %v372, %v371
    %389 = vmatpush.bf16.msra.mxu0 %v380
    %390 = vmatpush.bf16.msra.mxu0 %v379
    %391 = vmatpush.bf16.msra.mxu0 %v378
    %392 = vmatpush.bf16.msra.mxu0 %v377
    %393 = vmatpush.bf16.msra.mxu0 %v376
    %394 = vmatpush.bf16.msra.mxu0 %v375
    %395 = vmatpush.bf16.msra.mxu0 %v374
    %396 = vmatpush.bf16.msra.mxu0 %v373
    %397 = vmatmul.bf16.gmra.mxu0 %v318
    %v398 = vpop.f32.mrf.mxu0
    %v399 = vadd.f32 %v339, %v398
    %v400 = vpop.f32.mrf.mxu0
    %401 = vdwg.mxu0
    %s402 = scalar_lea.vmem %s7, 1
    %v403 = vld [vmem:[%s402] sm:$0x1]
    %s404 = scalar_lea.vmem %s8, 1
    %v405 = vld [vmem:[%s404] sm:$0x1]
    %v406 = vmax.f32 %v399, 0.0
    %407 = vadd.xlane.f32.xlu0 %v406
    %v408 = vpop.xlane.xlu0 %407
    %v409 = vmul.f32 %v408, 0.03125
    %v410 = vmul.f32 %v406, %v406
    %411 = vadd.xlane.f32.xlu0 %v410
    %v412 = vpop.xlane.xlu0 %411
    %v413 = vmul.f32 %v412, 0.03125
    %v414 = vmul.f32 %v409, %v409
    %v415 = vsub.f32 %v413, %v414
    %v416 = vmax.f32 %v415, 0.0
    %v417 = vsub.f32 %v406, %v409
    %v418 = vadd.f32 %v416, 1e-05
    %v419 = vrsqrt.pop %v418
    %v420 = vmul.f32 %v419, %v418
    %v421 = vmul.f32 %v420, %v419
    %v422 = vmul.f32 0.5, %v421
    %v423 = vsub.f32 1.5, %v422
    %v424 = vmul.f32 %v419, %v423
    %vm425 = vweird.f32 %v418
    %vm426 = vweird.f32 %v419
    %vm427 = vmor %vm425, %vm426
    %v428 = vsel %vm427, %v419, %v424
    %v429 = vmul.f32 %v417, %v428
    %v431 = vperm.slane %v403, 0
    %v433 = vmul.f32 %v429, %v431
    %v435 = vperm.slane %v405, 0
    %v437 = vadd.f32 %v433, %v435
    %v438 = vpack.c.bf16 %v437, %v437
    %v439 = vld [vmem:[#allocation7] sm:$0xf]
    %v440 = vld [vmem:[#allocation7 + $0x4] sm:$0xf]
    %v441 = vld [vmem:[#allocation7 + $0x8] sm:$0xf]
    %v442 = vld [vmem:[#allocation7 + $0xc] sm:$0xf]
    %v443 = vld [vmem:[#allocation7 + $0x10] sm:$0xf]
    %v444 = vld [vmem:[#allocation7 + $0x14] sm:$0xf]
    %v445 = vld [vmem:[#allocation7 + $0x18] sm:$0xf]
    %v446 = vld [vmem:[#allocation7 + $0x1c] sm:$0xf]
    %v447 = vld [vmem:[#allocation7 + $0x20] sm:$0xf]
    %v448 = vld [vmem:[#allocation7 + $0x24] sm:$0xf]
    %v449 = vld [vmem:[#allocation7 + $0x28] sm:$0xf]
    %v450 = vld [vmem:[#allocation7 + $0x2c] sm:$0xf]
    %v451 = vld [vmem:[#allocation7 + $0x30] sm:$0xf]
    %v452 = vld [vmem:[#allocation7 + $0x34] sm:$0xf]
    %v453 = vld [vmem:[#allocation7 + $0x38] sm:$0xf]
    %v454 = vld [vmem:[#allocation7 + $0x3c] sm:$0xf]
    %v455 = vld [vmem:[%s10] sm:$0x1]
    %v457 = vperm.slane %v455, 0
    %v475 = vunpack.c.l.b16 %v439
    %v476 = vunpack.c.l.b16 %v440
    %v477 = vunpack.c.l.b16 %v441
    %v478 = vunpack.c.l.b16 %v442
    %v479 = vunpack.c.l.b16 %v443
    %v480 = vunpack.c.l.b16 %v444
    %v481 = vunpack.c.l.b16 %v445
    %v482 = vunpack.c.l.b16 %v446
    %v483 = vunpack.c.l.b16 %v447
    %v484 = vunpack.c.l.b16 %v448
    %v485 = vunpack.c.l.b16 %v449
    %v486 = vunpack.c.l.b16 %v450
    %v487 = vunpack.c.l.b16 %v451
    %v488 = vunpack.c.l.b16 %v452
    %v489 = vunpack.c.l.b16 %v453
    %v490 = vunpack.c.l.b16 %v454
    %v491 = vpack.c.b16 %v476, %v475
    %v492 = vpack.c.b16 %v478, %v477
    %v493 = vpack.c.b16 %v480, %v479
    %v494 = vpack.c.b16 %v482, %v481
    %v495 = vpack.c.b16 %v484, %v483
    %v496 = vpack.c.b16 %v486, %v485
    %v497 = vpack.c.b16 %v488, %v487
    %v498 = vpack.c.b16 %v490, %v489
    %507 = vmatpush.bf16.msra.mxu0 %v498
    %508 = vmatpush.bf16.msra.mxu0 %v497
    %509 = vmatpush.bf16.msra.mxu0 %v496
    %510 = vmatpush.bf16.msra.mxu0 %v495
    %511 = vmatpush.bf16.msra.mxu0 %v494
    %512 = vmatpush.bf16.msra.mxu0 %v493
    %513 = vmatpush.bf16.msra.mxu0 %v492
    %514 = vmatpush.bf16.msra.mxu0 %v491
    %515 = vmatmul.bf16.gmra.mxu0 %v438
    %v516 = vpop.f32.mrf.mxu0
    %v517 = vadd.f32 %v457, %v516
    %v518 = vpop.f32.mrf.mxu0
    %519 = vdwg.mxu0
    %520 = vst [vmem:[#allocation8] sm:$0xff] %v517
    // Predicated region
    $region58: #{_mlp_forward_impl.1} parent=1 // pred_check
      _
    $region59: #{_mlp_forward_impl.1} parent=1 // pred_check_branch
      %522 = sbr.rel (0) target = $region61
    $region60: #{_mlp_forward_impl.1} parent=1 // pred_region
      %524 = vsyncadd [#allocation4], 0
      %s526 = sshll.u32 [#allocation8], 4
      %s527 = int_to_ptr.vmem [resolvable:$true] %s526
      %s528 = sshll.u32 %s11, 4
      %s529 = int_to_ptr.hbm [resolvable:$true] %s528
      %531 = dma.vmem_to_hbm [thread:$0]  %s527, 128, %s529, [#allocation4]
    $region61: #{_mlp_forward_impl.1} parent=1 // pred_fallthru
      _
    // Predicated region
    $region62: #{_mlp_forward_impl.1} parent=1 // pred_check
      _
    $region63: #{_mlp_forward_impl.1} parent=1 // pred_check_branch
      %533 = sbr.rel (0) target = $region65
    $region64: #{_mlp_forward_impl.1} parent=1 // pred_region
      %535 = dma.done [#allocation4], 128
    $region65: #{_mlp_forward_impl.1} parent=1 // pred_fallthru
      _
    %536 = vsyncpa [#allocation3], 1
    %537 = vsyncpa [#allocation6], 1
    %538 = vsyncpa [#allocation4], 1

// kernel: _mlp_forward_impl.1
$region0: #{_mlp_forward_impl.1}
  #allocation0 [shape = 'u32[]', space=smem, size = 0x4, offset = 0x4, fixed_abs, tag = 'smem constant byte address 0x4 - core index']
  #allocation1 [shape = 'u32[72,128]{1,0:T(1,128)}', space=vmem, size = 0x9000, scoped, tag = 'internal scratch']
  %s0 = inlined_call_operand.vmem [shape: bf16[8,128], index: 0, kind: input, shape index: {}]
  %s1 = inlined_call_operand.hbm [shape: bf16[128,128], index: 1, kind: input, shape index: {}]
  %s2 = inlined_call_operand.vmem [shape: f32[1,128], index: 2, kind: input, shape index: {}]
  %s3 = inlined_call_operand.vmem [shape: f32[1,128], index: 3, kind: input, shape index: {}]
  %s4 = inlined_call_operand.vmem [shape: f32[1,128], index: 4, kind: input, shape index: {}]
  %s5 = inlined_call_operand.hbm [shape: bf16[2,128,128], index: 5, kind: input, shape index: {}]
  %s6 = inlined_call_operand.vmem [shape: f32[2,1,128], index: 6, kind: input, shape index: {}]
  %s7 = inlined_call_operand.vmem [shape: f32[2,1,128], index: 7, kind: input, shape index: {}]
  %s8 = inlined_call_operand.vmem [shape: f32[2,1,128], index: 8, kind: input, shape index: {}]
  %s9 = inlined_call_operand.hbm [shape: bf16[128,128], index: 9, kind: input, shape index: {}]
  %s10 = inlined_call_operand.vmem [shape: f32[1,128], index: 10, kind: input, shape index: {}]
  %s11 = inlined_call_operand.hbm [shape: f32[8,128], index: 11, kind: output, shape index: {}]
  %s12 = sld [smem:[#allocation0]]
  $region66: #{_mlp_forward_impl.1} parent=0
    _
  %s14 = ssub.s32 1, %s12
  %s15 = scalar_select 0, %s14, %s12
  $region1: #{_mlp_forward_impl.1} parent=0
    #allocation2 [shape = 'u8[32768]{0}', space=vmem, size = 0x8000, scoped, tag = 'input window, operand 1, single buffered']
    #allocation3 [shape = 's32[1]{0}', space=sflag, size = 0x4, scoped, tag = 'scoped memory for _mlp_forward_impl.1']
    #allocation4 [shape = 's32[1]{0}', space=sflag, size = 0x4, scoped, tag = 'scoped memory for _mlp_forward_impl.1']
    #allocation5 [shape = 'u8[65536]{0}', space=vmem, size = 0x10000, scoped, tag = 'input window, operand 5, single buffered']
    #allocation6 [shape = 's32[1]{0}', space=sflag, size = 0x4, scoped, tag = 'scoped memory for _mlp_forward_impl.1']
    #allocation7 [shape = 'u8[32768]{0}', space=vmem, size = 0x8000, scoped, tag = 'input window, operand 9, single buffered']
    #allocation8 [shape = 'u8[4096]{0}', space=vmem, size = 0x1000, scoped, tag = 'output window, operand 0, single buffered']
    %16 = vsyncpa [#allocation3], 0
    %17 = vsyncpa [#allocation6], 0
    %18 = vsyncpa [#allocation4], 0
    // Predicated region
    $region2: #{_mlp_forward_impl.1} parent=1 // pred_check
      _
    $region3: #{_mlp_forward_impl.1} parent=1 // pred_check_branch
      %20 = sbr.rel (0) target = $region5
    $region4: #{_mlp_forward_impl.1} parent=1 // pred_region
      _
    $region5: #{_mlp_forward_impl.1} parent=1 // pred_fallthru
      _
    // Predicated region
    $region6: #{_mlp_forward_impl.1} parent=1 // pred_check
      _
    $region7: #{_mlp_forward_impl.1} parent=1 // pred_check_branch
      %22 = sbr.rel (0) target = $region9
    $region8: #{_mlp_forward_impl.1} parent=1 // pred_region
      %24 = vsyncadd [#allocation3], 0
      %s25 = sshll.u32 %s1, 4
      %s26 = int_to_ptr.hbm [resolvable:$true] %s25
      %s27 = sshll.u32 [#allocation2], 4
      %s28 = int_to_ptr.vmem [resolvable:$true] %s27
      %33 = dma.hbm_to_vmem [thread:$0]  %s26, 1024, %s28, [#allocation3], 64, 64, 4
    $region9: #{_mlp_forward_impl.1} parent=1 // pred_fallthru
      _
    // Predicated region
    $region10: #{_mlp_forward_impl.1} parent=1 // pred_check
      _
    $region11: #{_mlp_forward_impl.1} parent=1 // pred_check_branch
      %35 = sbr.rel (0) target = $region13
    $region12: #{_mlp_forward_impl.1} parent=1 // pred_region
      _
    $region13: #{_mlp_forward_impl.1} parent=1 // pred_fallthru
      _
    // Predicated region
    $region14: #{_mlp_forward_impl.1} parent=1 // pred_check
      _
    $region15: #{_mlp_forward_impl.1} parent=1 // pred_check_branch
      %37 = sbr.rel (0) target = $region17
    $region16: #{_mlp_forward_impl.1} parent=1 // pred_region
      _
    $region17: #{_mlp_forward_impl.1} parent=1 // pred_fallthru
      _
    // Predicated region
    $region18: #{_mlp_forward_impl.1} parent=1 // pred_check
      _
    $region19: #{_mlp_forward_impl.1} parent=1 // pred_check_branch
      %39 = sbr.rel (0) target = $region21
    $region20: #{_mlp_forward_impl.1} parent=1 // pred_region
      _
    $region21: #{_mlp_forward_impl.1} parent=1 // pred_fallthru
      _
    // Predicated region
    $region22: #{_mlp_forward_impl.1} parent=1 // pred_check
      _
    $region23: #{_mlp_forward_impl.1} parent=1 // pred_check_branch
      %41 = sbr.rel (0) target = $region25
    $region24: #{_mlp_forward_impl.1} parent=1 // pred_region
      %43 = vsyncadd [#allocation6], 0
      %s44 = sshll.u32 %s5, 4
      %s45 = int_to_ptr.hbm [resolvable:$true] %s44
      %s46 = sshll.u32 [#allocation5], 4
      %s47 = int_to_ptr.vmem [resolvable:$true] %s46
      %52 = dma.hbm_to_vmem [thread:$0]  %s45, 2048, %s47, [#allocation6], 64, 64, 4
    $region25: #{_mlp_forward_impl.1} parent=1 // pred_fallthru
      _
    // Predicated region
    $region26: #{_mlp_forward_impl.1} parent=1 // pred_check
      _
    $region27: #{_mlp_forward_impl.1} parent=1 // pred_check_branch
      %54 = sbr.rel (0) target = $region29
    $region28: #{_mlp_forward_impl.1} parent=1 // pred_region
      _
    $region29: #{_mlp_forward_impl.1} parent=1 // pred_fallthru
      _
    // Predicated region
    $region30: #{_mlp_forward_impl.1} parent=1 // pred_check
      _
    $region31: #{_mlp_forward_impl.1} parent=1 // pred_check_branch
      %56 = sbr.rel (0) target = $region33
    $region32: #{_mlp_forward_impl.1} parent=1 // pred_region
      _
    $region33: #{_mlp_forward_impl.1} parent=1 // pred_fallthru
      _
    // Predicated region
    $region34: #{_mlp_forward_impl.1} parent=1 // pred_check
      _
    $region35: #{_mlp_forward_impl.1} parent=1 // pred_check_branch
      %58 = sbr.rel (0) target = $region37
    $region36: #{_mlp_forward_impl.1} parent=1 // pred_region
      _
    $region37: #{_mlp_forward_impl.1} parent=1 // pred_fallthru
      _
    // Predicated region
    $region38: #{_mlp_forward_impl.1} parent=1 // pred_check
      _
    $region39: #{_mlp_forward_impl.1} parent=1 // pred_check_branch
      %60 = sbr.rel (0) target = $region41
    $region40: #{_mlp_forward_impl.1} parent=1 // pred_region
      %62 = vsyncadd [#allocation6], 0
      %s63 = sshll.u32 %s9, 4
      %s64 = int_to_ptr.hbm [resolvable:$true] %s63
      %s65 = sshll.u32 [#allocation7], 4
      %s66 = int_to_ptr.vmem [resolvable:$true] %s65
      %71 = dma.hbm_to_vmem [thread:$0]  %s64, 1024, %s66, [#allocation6], 64, 64, 4
    $region41: #{_mlp_forward_impl.1} parent=1 // pred_fallthru
      _
    // Predicated region
    $region42: #{_mlp_forward_impl.1} parent=1 // pred_check
      _
    $region43: #{_mlp_forward_impl.1} parent=1 // pred_check_branch
      %73 = sbr.rel (0) target = $region45
    $region44: #{_mlp_forward_impl.1} parent=1 // pred_region
      _
    $region45: #{_mlp_forward_impl.1} parent=1 // pred_fallthru
      _
    // Predicated region
    $region46: #{_mlp_forward_impl.1} parent=1 // pred_check
      _
    $region47: #{_mlp_forward_impl.1} parent=1 // pred_check_branch
      %75 = sbr.rel (0) target = $region49
    $region48: #{_mlp_forward_impl.1} parent=1 // pred_region
      %77 = dma.done [#allocation3], 1024
    $region49: #{_mlp_forward_impl.1} parent=1 // pred_fallthru
      _
    // Predicated region
    $region50: #{_mlp_forward_impl.1} parent=1 // pred_check
      _
    $region51: #{_mlp_forward_impl.1} parent=1 // pred_check_branch
      %79 = sbr.rel (0) target = $region53
    $region52: #{_mlp_forward_impl.1} parent=1 // pred_region
      %81 = dma.done [#allocation6], 2048
    $region53: #{_mlp_forward_impl.1} parent=1 // pred_fallthru
      _
    // Predicated region
    $region54: #{_mlp_forward_impl.1} parent=1 // pred_check
      _
    $region55: #{_mlp_forward_impl.1} parent=1 // pred_check_branch
      %83 = sbr.rel (0) target = $region57
    $region56: #{_mlp_forward_impl.1} parent=1 // pred_region
      %85 = dma.done [#allocation6], 1024
    $region57: #{_mlp_forward_impl.1} parent=1 // pred_fallthru
      _
    %v86 = vld [vmem:[%s0] sm:$0xf]
    %v87 = vld [vmem:[#allocation2] sm:$0xf]
    %v88 = vld [vmem:[#allocation2 + $0x4] sm:$0xf]
    %v89 = vld [vmem:[#allocation2 + $0x8] sm:$0xf]
    %v90 = vld [vmem:[#allocation2 + $0xc] sm:$0xf]
    %v91 = vld [vmem:[#allocation2 + $0x10] sm:$0xf]
    %v92 = vld [vmem:[#allocation2 + $0x14] sm:$0xf]
    %v93 = vld [vmem:[#allocation2 + $0x18] sm:$0xf]
    %v94 = vld [vmem:[#allocation2 + $0x1c] sm:$0xf]
    %v95 = vld [vmem:[#allocation2 + $0x20] sm:$0xf]
    %v96 = vld [vmem:[#allocation2 + $0x24] sm:$0xf]
    %v97 = vld [vmem:[#allocation2 + $0x28] sm:$0xf]
    %v98 = vld [vmem:[#allocation2 + $0x2c] sm:$0xf]
    %v99 = vld [vmem:[#allocation2 + $0x30] sm:$0xf]
    %v100 = vld [vmem:[#allocation2 + $0x34] sm:$0xf]
    %v101 = vld [vmem:[#allocation2 + $0x38] sm:$0xf]
    %v102 = vld [vmem:[#allocation2 + $0x3c] sm:$0xf]
    %v103 = vld [vmem:[%s2] sm:$0x1]
    %v105 = vperm.slane %v103, 0
    %v123 = vunpack.c.l.b16 %v87
    %v124 = vunpack.c.l.b16 %v88
    %v125 = vunpack.c.l.b16 %v89
    %v126 = vunpack.c.l.b16 %v90
    %v127 = vunpack.c.l.b16 %v91
    %v128 = vunpack.c.l.b16 %v92
    %v129 = vunpack.c.l.b16 %v93
    %v130 = vunpack.c.l.b16 %v94
    %v131 = vunpack.c.l.b16 %v95
    %v132 = vunpack.c.l.b16 %v96
    %v133 = vunpack.c.l.b16 %v97
    %v134 = vunpack.c.l.b16 %v98
    %v135 = vunpack.c.l.b16 %v99
    %v136 = vunpack.c.l.b16 %v100
    %v137 = vunpack.c.l.b16 %v101
    %v138 = vunpack.c.l.b16 %v102
    %v139 = vpack.c.b16 %v124, %v123
    %v140 = vpack.c.b16 %v126, %v125
    %v141 = vpack.c.b16 %v128, %v127
    %v142 = vpack.c.b16 %v130, %v129
    %v143 = vpack.c.b16 %v132, %v131
    %v144 = vpack.c.b16 %v134, %v133
    %v145 = vpack.c.b16 %v136, %v135
    %v146 = vpack.c.b16 %v138, %v137
    %155 = vmatpush.bf16.msra.mxu0 %v146
    %156 = vmatpush.bf16.msra.mxu0 %v145
    %157 = vmatpush.bf16.msra.mxu0 %v144
    %158 = vmatpush.bf16.msra.mxu0 %v143
    %159 = vmatpush.bf16.msra.mxu0 %v142
    %160 = vmatpush.bf16.msra.mxu0 %v141
    %161 = vmatpush.bf16.msra.mxu0 %v140
    %162 = vmatpush.bf16.msra.mxu0 %v139
    %163 = vmatmul.bf16.gmra.mxu0 %v86
    %v164 = vpop.f32.mrf.mxu0
    %v165 = vadd.f32 %v105, %v164
    %v166 = vpop.f32.mrf.mxu0
    %167 = vdwg.mxu0
    %v168 = vld [vmem:[%s3] sm:$0x1]
    %v169 = vld [vmem:[%s4] sm:$0x1]
    %v170 = vmax.f32 %v165, 0.0
    %171 = vadd.xlane.f32.xlu0 %v170
    %v172 = vpop.xlane.xlu0 %171
    %v173 = vmul.f32 %v172, 0.03125
    %v174 = vmul.f32 %v170, %v170
    %175 = vadd.xlane.f32.xlu0 %v174
    %v176 = vpop.xlane.xlu0 %175
    %v177 = vmul.f32 %v176, 0.03125
    %v178 = vmul.f32 %v173, %v173
    %v179 = vsub.f32 %v177, %v178
    %v180 = vmax.f32 %v179, 0.0
    %v181 = vsub.f32 %v170, %v173
    %v182 = vadd.f32 %v180, 1e-05
    %v183 = vrsqrt.pop %v182
    %v184 = vmul.f32 %v183, %v182
    %v185 = vmul.f32 %v184, %v183
    %v186 = vmul.f32 0.5, %v185
    %v187 = vsub.f32 1.5, %v186
    %v188 = vmul.f32 %v183, %v187
    %vm189 = vweird.f32 %v182
    %vm190 = vweird.f32 %v183
    %vm191 = vmor %vm189, %vm190
    %v192 = vsel %vm191, %v183, %v188
    %v193 = vmul.f32 %v181, %v192
    %v195 = vperm.slane %v168, 0
    %v197 = vmul.f32 %v193, %v195
    %v199 = vperm.slane %v169, 0
    %v201 = vadd.f32 %v197, %v199
    %v202 = vpack.c.bf16 %v201, %v201
    %v203 = vld [vmem:[#allocation5] sm:$0xf]
    %v204 = vld [vmem:[#allocation5 + $0x4] sm:$0xf]
    %v205 = vld [vmem:[#allocation5 + $0x8] sm:$0xf]
    %v206 = vld [vmem:[#allocation5 + $0xc] sm:$0xf]
    %v207 = vld [vmem:[#allocation5 + $0x10] sm:$0xf]
    %v208 = vld [vmem:[#allocation5 + $0x14] sm:$0xf]
    %v209 = vld [vmem:[#allocation5 + $0x18] sm:$0xf]
    %v210 = vld [vmem:[#allocation5 + $0x1c] sm:$0xf]
    %v211 = vld [vmem:[#allocation5 + $0x20] sm:$0xf]
    %v212 = vld [vmem:[#allocation5 + $0x24] sm:$0xf]
    %v213 = vld [vmem:[#allocation5 + $0x28] sm:$0xf]
    %v214 = vld [vmem:[#allocation5 + $0x2c] sm:$0xf]
    %v215 = vld [vmem:[#allocation5 + $0x30] sm:$0xf]
    %v216 = vld [vmem:[#allocation5 + $0x34] sm:$0xf]
    %v217 = vld [vmem:[#allocation5 + $0x38] sm:$0xf]
    %v218 = vld [vmem:[#allocation5 + $0x3c] sm:$0xf]
    %v219 = vld [vmem:[%s6] sm:$0x1]
    %v221 = vperm.slane %v219, 0
    %v239 = vunpack.c.l.b16 %v203
    %v240 = vunpack.c.l.b16 %v204
    %v241 = vunpack.c.l.b16 %v205
    %v242 = vunpack.c.l.b16 %v206
    %v243 = vunpack.c.l.b16 %v207
    %v244 = vunpack.c.l.b16 %v208
    %v245 = vunpack.c.l.b16 %v209
    %v246 = vunpack.c.l.b16 %v210
    %v247 = vunpack.c.l.b16 %v211
    %v248 = vunpack.c.l.b16 %v212
    %v249 = vunpack.c.l.b16 %v213
    %v250 = vunpack.c.l.b16 %v214
    %v251 = vunpack.c.l.b16 %v215
    %v252 = vunpack.c.l.b16 %v216
    %v253 = vunpack.c.l.b16 %v217
    %v254 = vunpack.c.l.b16 %v218
    %v255 = vpack.c.b16 %v240, %v239
    %v256 = vpack.c.b16 %v242, %v241
    %v257 = vpack.c.b16 %v244, %v243
    %v258 = vpack.c.b16 %v246, %v245
    %v259 = vpack.c.b16 %v248, %v247
    %v260 = vpack.c.b16 %v250, %v249
    %v261 = vpack.c.b16 %v252, %v251
    %v262 = vpack.c.b16 %v254, %v253
    %271 = vmatpush.bf16.msra.mxu0 %v262
    %272 = vmatpush.bf16.msra.mxu0 %v261
    %273 = vmatpush.bf16.msra.mxu0 %v260
    %274 = vmatpush.bf16.msra.mxu0 %v259
    %275 = vmatpush.bf16.msra.mxu0 %v258
    %276 = vmatpush.bf16.msra.mxu0 %v257
    %277 = vmatpush.bf16.msra.mxu0 %v256
    %278 = vmatpush.bf16.msra.mxu0 %v255
    %279 = vmatmul.bf16.gmra.mxu0 %v202
    %v280 = vpop.f32.mrf.mxu0
    %v281 = vadd.f32 %v221, %v280
    %v282 = vpop.f32.mrf.mxu0
    %283 = vdwg.mxu0
    %v284 = vld [vmem:[%s7] sm:$0x1]
    %v285 = vld [vmem:[%s8] sm:$0x1]
    %v286 = vmax.f32 %v281, 0.0
    %287 = vadd.xlane.f32.xlu0 %v286
    %v288 = vpop.xlane.xlu0 %287
    %v289 = vmul.f32 %v288, 0.03125
    %v290 = vmul.f32 %v286, %v286
    %291 = vadd.xlane.f32.xlu0 %v290
    %v292 = vpop.xlane.xlu0 %291
    %v293 = vmul.f32 %v292, 0.03125
    %v294 = vmul.f32 %v289, %v289
    %v295 = vsub.f32 %v293, %v294
    %v296 = vmax.f32 %v295, 0.0
    %v297 = vsub.f32 %v286, %v289
    %v298 = vadd.f32 %v296, 1e-05
    %v299 = vrsqrt.pop %v298
    %v300 = vmul.f32 %v299, %v298
    %v301 = vmul.f32 %v300, %v299
    %v302 = vmul.f32 0.5, %v301
    %v303 = vsub.f32 1.5, %v302
    %v304 = vmul.f32 %v299, %v303
    %vm305 = vweird.f32 %v298
    %vm306 = vweird.f32 %v299
    %vm307 = vmor %vm305, %vm306
    %v308 = vsel %vm307, %v299, %v304
    %v309 = vmul.f32 %v297, %v308
    %v311 = vperm.slane %v284, 0
    %v313 = vmul.f32 %v309, %v311
    %v315 = vperm.slane %v285, 0
    %v317 = vadd.f32 %v313, %v315
    %v318 = vpack.c.bf16 %v317, %v317
    %s319 = scalar_lea.vmem [#allocation5], 64
    %v320 = vld [vmem:[%s319] sm:$0xf]
    %v321 = vld [vmem:[%s319 + $0x4] sm:$0xf]
    %v322 = vld [vmem:[%s319 + $0x8] sm:$0xf]
    %v323 = vld [vmem:[%s319 + $0xc] sm:$0xf]
    %v324 = vld [vmem:[%s319 + $0x10] sm:$0xf]
    %v325 = vld [vmem:[%s319 + $0x14] sm:$0xf]
    %v326 = vld [vmem:[%s319 + $0x18] sm:$0xf]
    %v327 = vld [vmem:[%s319 + $0x1c] sm:$0xf]
    %v328 = vld [vmem:[%s319 + $0x20] sm:$0xf]
    %v329 = vld [vmem:[%s319 + $0x24] sm:$0xf]
    %v330 = vld [vmem:[%s319 + $0x28] sm:$0xf]
    %v331 = vld [vmem:[%s319 + $0x2c] sm:$0xf]
    %v332 = vld [vmem:[%s319 + $0x30] sm:$0xf]
    %v333 = vld [vmem:[%s319 + $0x34] sm:$0xf]
    %v334 = vld [vmem:[%s319 + $0x38] sm:$0xf]
    %v335 = vld [vmem:[%s319 + $0x3c] sm:$0xf]
    %s336 = scalar_lea.vmem %s6, 1
    %v337 = vld [vmem:[%s336] sm:$0x1]
    %v339 = vperm.slane %v337, 0
    %v357 = vunpack.c.l.b16 %v320
    %v358 = vunpack.c.l.b16 %v321
    %v359 = vunpack.c.l.b16 %v322
    %v360 = vunpack.c.l.b16 %v323
    %v361 = vunpack.c.l.b16 %v324
    %v362 = vunpack.c.l.b16 %v325
    %v363 = vunpack.c.l.b16 %v326
    %v364 = vunpack.c.l.b16 %v327
    %v365 = vunpack.c.l.b16 %v328
    %v366 = vunpack.c.l.b16 %v329
    %v367 = vunpack.c.l.b16 %v330
    %v368 = vunpack.c.l.b16 %v331
    %v369 = vunpack.c.l.b16 %v332
    %v370 = vunpack.c.l.b16 %v333
    %v371 = vunpack.c.l.b16 %v334
    %v372 = vunpack.c.l.b16 %v335
    %v373 = vpack.c.b16 %v358, %v357
    %v374 = vpack.c.b16 %v360, %v359
    %v375 = vpack.c.b16 %v362, %v361
    %v376 = vpack.c.b16 %v364, %v363
    %v377 = vpack.c.b16 %v366, %v365
    %v378 = vpack.c.b16 %v368, %v367
    %v379 = vpack.c.b16 %v370, %v369
    %v380 = vpack.c.b16 %v372, %v371
    %389 = vmatpush.bf16.msra.mxu0 %v380
    %390 = vmatpush.bf16.msra.mxu0 %v379
    %391 = vmatpush.bf16.msra.mxu0 %v378
    %392 = vmatpush.bf16.msra.mxu0 %v377
    %393 = vmatpush.bf16.msra.mxu0 %v376
    %394 = vmatpush.bf16.msra.mxu0 %v375
    %395 = vmatpush.bf16.msra.mxu0 %v374
    %396 = vmatpush.bf16.msra.mxu0 %v373
    %397 = vmatmul.bf16.gmra.mxu0 %v318
    %v398 = vpop.f32.mrf.mxu0
    %v399 = vadd.f32 %v339, %v398
    %v400 = vpop.f32.mrf.mxu0
    %401 = vdwg.mxu0
    %s402 = scalar_lea.vmem %s7, 1
    %v403 = vld [vmem:[%s402] sm:$0x1]
    %s404 = scalar_lea.vmem %s8, 1
    %v405 = vld [vmem:[%s404] sm:$0x1]
    %v406 = vmax.f32 %v399, 0.0
    %407 = vadd.xlane.f32.xlu0 %v406
    %v408 = vpop.xlane.xlu0 %407
    %v409 = vmul.f32 %v408, 0.03125
    %v410 = vmul.f32 %v406, %v406
    %411 = vadd.xlane.f32.xlu0 %v410
    %v412 = vpop.xlane.xlu0 %411
    %v413 = vmul.f32 %v412, 0.03125
    %v414 = vmul.f32 %v409, %v409
    %v415 = vsub.f32 %v413, %v414
    %v416 = vmax.f32 %v415, 0.0
    %v417 = vsub.f32 %v406, %v409
    %v418 = vadd.f32 %v416, 1e-05
    %v419 = vrsqrt.pop %v418
    %v420 = vmul.f32 %v419, %v418
    %v421 = vmul.f32 %v420, %v419
    %v422 = vmul.f32 0.5, %v421
    %v423 = vsub.f32 1.5, %v422
    %v424 = vmul.f32 %v419, %v423
    %vm425 = vweird.f32 %v418
    %vm426 = vweird.f32 %v419
    %vm427 = vmor %vm425, %vm426
    %v428 = vsel %vm427, %v419, %v424
    %v429 = vmul.f32 %v417, %v428
    %v431 = vperm.slane %v403, 0
    %v433 = vmul.f32 %v429, %v431
    %v435 = vperm.slane %v405, 0
    %v437 = vadd.f32 %v433, %v435
    %v438 = vpack.c.bf16 %v437, %v437
    %v439 = vld [vmem:[#allocation7] sm:$0xf]
    %v440 = vld [vmem:[#allocation7 + $0x4] sm:$0xf]
    %v441 = vld [vmem:[#allocation7 + $0x8] sm:$0xf]
    %v442 = vld [vmem:[#allocation7 + $0xc] sm:$0xf]
    %v443 = vld [vmem:[#allocation7 + $0x10] sm:$0xf]
    %v444 = vld [vmem:[#allocation7 + $0x14] sm:$0xf]
    %v445 = vld [vmem:[#allocation7 + $0x18] sm:$0xf]
    %v446 = vld [vmem:[#allocation7 + $0x1c] sm:$0xf]
    %v447 = vld [vmem:[#allocation7 + $0x20] sm:$0xf]
    %v448 = vld [vmem:[#allocation7 + $0x24] sm:$0xf]
    %v449 = vld [vmem:[#allocation7 + $0x28] sm:$0xf]
    %v450 = vld [vmem:[#allocation7 + $0x2c] sm:$0xf]
    %v451 = vld [vmem:[#allocation7 + $0x30] sm:$0xf]
    %v452 = vld [vmem:[#allocation7 + $0x34] sm:$0xf]
    %v453 = vld [vmem:[#allocation7 + $0x38] sm:$0xf]
    %v454 = vld [vmem:[#allocation7 + $0x3c] sm:$0xf]
    %v455 = vld [vmem:[%s10] sm:$0x1]
    %v457 = vperm.slane %v455, 0
    %v475 = vunpack.c.l.b16 %v439
    %v476 = vunpack.c.l.b16 %v440
    %v477 = vunpack.c.l.b16 %v441
    %v478 = vunpack.c.l.b16 %v442
    %v479 = vunpack.c.l.b16 %v443
    %v480 = vunpack.c.l.b16 %v444
    %v481 = vunpack.c.l.b16 %v445
    %v482 = vunpack.c.l.b16 %v446
    %v483 = vunpack.c.l.b16 %v447
    %v484 = vunpack.c.l.b16 %v448
    %v485 = vunpack.c.l.b16 %v449
    %v486 = vunpack.c.l.b16 %v450
    %v487 = vunpack.c.l.b16 %v451
    %v488 = vunpack.c.l.b16 %v452
    %v489 = vunpack.c.l.b16 %v453
    %v490 = vunpack.c.l.b16 %v454
    %v491 = vpack.c.b16 %v476, %v475
    %v492 = vpack.c.b16 %v478, %v477
    %v493 = vpack.c.b16 %v480, %v479
    %v494 = vpack.c.b16 %v482, %v481
    %v495 = vpack.c.b16 %v484, %v483
    %v496 = vpack.c.b16 %v486, %v485
    %v497 = vpack.c.b16 %v488, %v487
    %v498 = vpack.c.b16 %v490, %v489
    %507 = vmatpush.bf16.msra.mxu0 %v498
    %508 = vmatpush.bf16.msra.mxu0 %v497
    %509 = vmatpush.bf16.msra.mxu0 %v496
    %510 = vmatpush.bf16.msra.mxu0 %v495
    %511 = vmatpush.bf16.msra.mxu0 %v494
    %512 = vmatpush.bf16.msra.mxu0 %v493
    %513 = vmatpush.bf16.msra.mxu0 %v492
    %514 = vmatpush.bf16.msra.mxu0 %v491
    %515 = vmatmul.bf16.gmra.mxu0 %v438
    %v516 = vpop.f32.mrf.mxu0
    %v517 = vadd.f32 %v457, %v516
    %v518 = vpop.f32.mrf.mxu0
    %519 = vdwg.mxu0
    %520 = vst [vmem:[#allocation8] sm:$0xff] %v517
    // Predicated region
    $region58: #{_mlp_forward_impl.1} parent=1 // pred_check
      _
    $region59: #{_mlp_forward_impl.1} parent=1 // pred_check_branch
      %522 = sbr.rel (0) target = $region61
    $region60: #{_mlp_forward_impl.1} parent=1 // pred_region
      %524 = vsyncadd [#allocation4], 0
      %s526 = sshll.u32 [#allocation8], 4
      %s527 = int_to_ptr.vmem [resolvable:$true] %s526
      %s528 = sshll.u32 %s11, 4
      %s529 = int_to_ptr.hbm [resolvable:$true] %s528
      %531 = dma.vmem_to_hbm [thread:$0]  %s527, 128, %s529, [#allocation4]
    $region61: #{_mlp_forward_impl.1} parent=1 // pred_fallthru
      _
    // Predicated region
    $region62: #{_mlp_forward_impl.1} parent=1 // pred_check
      _
    $region63: #{_mlp_forward_impl.1} parent=1 // pred_check_branch
      %533 = sbr.rel (0) target = $region65
    $region64: #{_mlp_forward_impl.1} parent=1 // pred_region
      %535 = dma.done [#allocation4], 128
    $region65: #{_mlp_forward_impl.1} parent=1 // pred_fallthru
      _
    %536 = vsyncpa [#allocation3], 1
    %537 = vsyncpa [#allocation6], 1
    %538 = vsyncpa [#allocation4], 1

</llo_original>
